<compile_context>
chip_gen: v5e
topology: v5e:2x2
jax: 0.10.0
libtpu: 0.0.40
codegen_flags: <defaults>
</compile_context>

<pallas_src>
import functools

import jax
import jax.numpy as jnp
from jax.experimental import pallas as pl
from jax.experimental.pallas import tpu as pltpu

EPS = 1e-5


# ----------------------------------------------------------------------------
# Kernels
# ----------------------------------------------------------------------------
def conv_bn_kernel(x_ref, w_ref, scale_ref, shift_ref, y_ref, stats_ref,
                   *, H, W, Cin, Cout, pre_act):
    # x_ref:     (1, H, W*Cin)       lane-dense NHWC input, one batch element
    # w_ref:     (3, W*Cin, W*Cout)  banded bf16 weights (W-padding folded in)
    # scale_ref: (1, W*Cin)          previous-layer BN scale, tiled over W
    # shift_ref: (1, W*Cin)          (both unused when pre_act=False)
    # y_ref:     (1, H, W*Cout)      lane-dense conv output
    # stats_ref: (1, 2, Cout)        per-batch [sum(y), sum(y*y)] partial stats
    x = x_ref[0]                                            # (H, W*Cin) f32
    if pre_act:
        # Fused BatchNorm affine + ReLU of the previous layer (lane dense).
        x = jnp.maximum(x * scale_ref[...] + shift_ref[...], 0.0)

    # Zero-pad H by one row on each side in VMEM (W padding lives in the
    # banded weights), instead of a jnp.pad HBM round-trip in the wrapper.
    zrow = jnp.zeros((1, W * Cin), jnp.float32)
    xp = jnp.concatenate([zrow, x, zrow], axis=0)           # (H+2, W*Cin)

    # 3x3 conv as three MXU matmuls with K = W*Cin and N = W*Cout (lane dense
    # result, no relayout), bf16 operands with f32 accumulation.
    acc = None
    for dy in range(3):
        lhs = xp[dy:dy + H, :].astype(jnp.bfloat16)         # (H, W*Cin)
        part = jnp.dot(lhs, w_ref[dy], preferred_element_type=jnp.float32)
        acc = part if acc is None else acc + part           # (H, W*Cout) f32

    # Conv bias intentionally dropped: train-mode BatchNorm subtracts the
    # batch mean, which cancels a per-channel bias exactly.
    y_ref[0] = acc

    # Fused per-batch BN statistics: per-channel sum and sum-of-squares.
    r = jnp.concatenate([jnp.sum(acc, axis=0, keepdims=True),
                         jnp.sum(acc * acc, axis=0, keepdims=True)],
                        axis=0)                             # (2, W*Cout)
    s = r[:, 0:Cout]
    for w in range(1, W):                                   # fold the W groups
        s = s + r[:, w * Cout:(w + 1) * Cout]
    stats_ref[0] = s                                        # (2, Cout)


def bn_relu_kernel(x_ref, scale_ref, shift_ref, o_ref):
    # Final BatchNorm affine + ReLU; all blocks lane dense:
    # x/o: (1, H, W*C), scale/shift: (1, W*C) (per-channel, tiled over W).
    o_ref[0] = jnp.maximum(x_ref[0] * scale_ref[...] + shift_ref[...], 0.0)


# ----------------------------------------------------------------------------
# Wrappers
# ----------------------------------------------------------------------------
def band_weights(w_hwio, W):
    """(3, 3, Cin, Cout) HWIO kernel -> (3, W*Cin, W*Cout) banded matrices.

    A padding=1 3x3 conv over a lane-dense (H, W*Cin) image becomes
        y[h] = sum_dy  x_hpad[h + dy] @ band[dy]
    The W-direction zero padding is encoded by the band structure (out-of-range
    taps simply have no rows)."""
    _, _, Cin, Cout = w_hwio.shape
    bands = []
    for dy in range(3):
        wcol = w_hwio[dy].reshape(3 * Cin, Cout)      # rows ordered (dx, ci)
        cols = []
        for w in range(W):
            lo, hi = (w - 1) * Cin, (w + 2) * Cin     # rows this column reads
            blk = wcol
            if lo < 0:                                # dx=-1 falls off the left
                blk = blk[-lo:]
                lo = 0
            if hi > W * Cin:                          # dx=+1 falls off the right
                blk = blk[:blk.shape[0] - (hi - W * Cin)]
                hi = W * Cin
            cols.append(jnp.pad(blk, ((lo, W * Cin - hi), (0, 0))))
        bands.append(jnp.concatenate(cols, axis=1))   # (W*Cin, W*Cout)
    return jnp.stack(bands, axis=0).astype(jnp.bfloat16)


def conv3x3_fused(x_ld, w_band, scale_t, shift_t, *, H, W, Cin, Cout, pre_act):
    """Fused [optional BN+ReLU of prev layer] -> conv3x3 -> partial BN stats."""
    N = x_ld.shape[0]
    wci, wco = W * Cin, W * Cout
    kernel = functools.partial(conv_bn_kernel, H=H, W=W, Cin=Cin, Cout=Cout,
                               pre_act=pre_act)
    return pl.pallas_call(
        kernel,
        out_shape=(jax.ShapeDtypeStruct((N, H, wco), jnp.float32),
                   jax.ShapeDtypeStruct((N, 2, Cout), jnp.float32)),
        grid=(N,),
        in_specs=[
            pl.BlockSpec((1, H, wci), lambda n: (n, 0, 0)),
            pl.BlockSpec((3, wci, wco), lambda n: (0, 0, 0)),
            pl.BlockSpec((1, wci), lambda n: (0, 0)),
            pl.BlockSpec((1, wci), lambda n: (0, 0)),
        ],
        out_specs=(
            pl.BlockSpec((1, H, wco), lambda n: (n, 0, 0)),
            pl.BlockSpec((1, 2, Cout), lambda n: (n, 0, 0)),
        ),
        compiler_params=pltpu.CompilerParams(dimension_semantics=("parallel",)),
    )(x_ld, w_band, scale_t, shift_t)


def bn_relu(y_ld, scale_t, shift_t):
    N, H, WC = y_ld.shape
    return pl.pallas_call(
        bn_relu_kernel,
        out_shape=jax.ShapeDtypeStruct((N, H, WC), jnp.float32),
        grid=(N,),
        in_specs=[
            pl.BlockSpec((1, H, WC), lambda n: (n, 0, 0)),
            pl.BlockSpec((1, WC), lambda n: (0, 0)),
            pl.BlockSpec((1, WC), lambda n: (0, 0)),
        ],
        out_specs=pl.BlockSpec((1, H, WC), lambda n: (n, 0, 0)),
        compiler_params=pltpu.CompilerParams(dimension_semantics=("parallel",)),
    )(y_ld, scale_t, shift_t)


def bn_affine(stats, count, gamma, beta, W):
    """Reduce (N, 2, C) partial sums -> train-mode BN affine (scale, shift),
    tiled to the lane-dense W*C layout."""
    s = jnp.sum(stats, axis=0)                            # (2, C)
    mean = s[0] / count
    var = jnp.maximum(s[1] / count - mean * mean, 0.0)    # guard tiny negatives
    scale = gamma * jax.lax.rsqrt(var + EPS)
    shift = beta - mean * scale
    C = gamma.shape[0]
    return (jnp.tile(scale, W).reshape(1, W * C),
            jnp.tile(shift, W).reshape(1, W * C))


@jax.jit
def double_conv(x_nchw, p):
    N, Cin, H, W = x_nchw.shape
    Cout = p["w1"].shape[-1]
    count = float(N * H * W)

    # NCHW -> lane-dense NHWC view (N, H, W*C); reshape of the contiguous
    # NHWC array is free.
    x_ld = jnp.transpose(x_nchw, (0, 2, 3, 1)).astype(jnp.float32)
    x_ld = x_ld.reshape(N, H, W * Cin)

    wb1 = band_weights(p["w1"], W)                        # (3, W*Cin,  W*Cout)
    wb2 = band_weights(p["w2"], W)                        # (3, W*Cout, W*Cout)
    dummy = jnp.zeros((1, W * Cin), jnp.float32)          # unused (pre_act=False)

    # Layer 1: conv + fused per-batch BN statistics.
    y1, st1 = conv3x3_fused(x_ld, wb1, dummy, dummy,
                            H=H, W=W, Cin=Cin, Cout=Cout, pre_act=False)
    sc1, sh1 = bn_affine(st1, count, p["g1"], p["beta1"], W)

    # Layer 2: BN1 + ReLU fused into the conv input load; stats fused again.
    y2, st2 = conv3x3_fused(y1, wb2, sc1, sh1,
                            H=H, W=W, Cin=Cout, Cout=Cout, pre_act=True)
    sc2, sh2 = bn_affine(st2, count, p["g2"], p["beta2"], W)

    # Final BN2 + ReLU (cannot be fused upstream: it needs conv2's batch stats).
    a2 = bn_relu(y2, sc2, sh2)                            # (N, H, W*Cout)

    return jnp.transpose(a2.reshape(N, H, W, Cout), (0, 3, 1, 2))


# ----------------------------------------------------------------------------
# Pure-JAX reference (mirrors the PyTorch forward, NCHW, f32, with conv bias)
# ----------------------------------------------------------------------------
def double_conv_ref(x, p):
    def conv(x, w_hwio, b):
        w_oihw = jnp.transpose(w_hwio, (3, 2, 0, 1))
        y = jax.lax.conv_general_dilated(
            x, w_oihw, window_strides=(1, 1), padding=((1, 1), (1, 1)),
            dimension_numbers=("NCHW", "OIHW", "NCHW"))
        return y + b[None, :, None, None]

    def bnrelu(x, g, b):
        mean = x.mean(axis=(0, 2, 3), keepdims=True)
        var = x.var(axis=(0, 2, 3), keepdims=True)   # biased, like torch BN fwd
        y = (x - mean) / jnp.sqrt(var + EPS)
        y = y * g[None, :, None, None] + b[None, :, None, None]
        return jnp.maximum(y, 0.0)

    y = bnrelu(conv(x, p["w1"], p["b1"]), p["g1"], p["beta1"])
    y = bnrelu(conv(y, p["w2"], p["b2"]), p["g2"], p["beta2"])
    return y


# ----------------------------------------------------------------------------
# Main
# ----------------------------------------------------------------------------
if __name__ == "__main__":
    N, IN_CH, OUT_CH, H, W = 2, 4, 8, 16, 16

    key = jax.random.PRNGKey(0)
    k = jax.random.split(key, 9)
    params = {
        # conv weights stored HWIO; biases kept only for the reference (the
        # kernel drops them since BatchNorm's mean subtraction cancels them).
        "w1": 0.2 * jax.random.normal(k[0], (3, 3, IN_CH, OUT_CH), jnp.float32),
        "b1": 0.1 * jax.random.normal(k[1], (OUT_CH,), jnp.float32),
        "g1": 1.0 + 0.1 * jax.random.normal(k[2], (OUT_CH,), jnp.float32),
        "beta1": 0.1 * jax.random.normal(k[3], (OUT_CH,), jnp.float32),
        "w2": 0.2 * jax.random.normal(k[4], (3, 3, OUT_CH, OUT_CH), jnp.float32),
        "b2": 0.1 * jax.random.normal(k[5], (OUT_CH,), jnp.float32),
        "g2": 1.0 + 0.1 * jax.random.normal(k[6], (OUT_CH,), jnp.float32),
        "beta2": 0.1 * jax.random.normal(k[7], (OUT_CH,), jnp.float32),
    }
    x = jax.random.normal(k[8], (N, IN_CH, H, W), jnp.float32)

    out = jax.block_until_ready(double_conv(x, params))
    ref = jax.block_until_ready(double_conv_ref(x, params))

    assert out.shape == (N, OUT_CH, H, W), out.shape
    # bf16 MXU operands (f32 accumulation) through two conv+BN layers -> use a
    # correspondingly looser tolerance than a pure-f32 kernel would need.
    assert jnp.allclose(out, ref, rtol=5e-2, atol=5e-2), \
        float(jnp.max(jnp.abs(out - ref)))

    print("KERNEL_OK")
</pallas_src>

<mosaic_0001>
module attributes {stable_mosaic.version = 11 : i64} {
  func.func @conv_bn_kernel(%arg0: i32, %arg1: memref<1x16x64xf32, #tpu.memory_space<vmem>>, %arg2: memref<3x64x128xbf16, #tpu.memory_space<vmem>>, %arg3: memref<1x64xf32, #tpu.memory_space<vmem>>, %arg4: memref<1x64xf32, #tpu.memory_space<vmem>>, %arg5: memref<1x16x128xf32, #tpu.memory_space<vmem>>, %arg6: memref<1x2x8xf32, #tpu.memory_space<vmem>>) attributes {dimension_semantics = [#tpu.dimension_semantics<parallel>], iteration_bounds = array<i64: 2>, scalar_prefetch = 0 : i64, scratch_operands = 0 : i64, tpu.core_type = #tpu.core_type<tc>, window_params = [{transform_indices = @transform_0, window_bounds = array<i64: 1, 16, 64>}, {pipeline_mode = #tpu.pipeline_mode<synchronous>, transform_indices = @transform_1, window_bounds = array<i64: 3, 64, 128>}, {pipeline_mode = #tpu.pipeline_mode<synchronous>, transform_indices = @transform_2, window_bounds = array<i64: 1, 64>}, {pipeline_mode = #tpu.pipeline_mode<synchronous>, transform_indices = @transform_3, window_bounds = array<i64: 1, 64>}, {transform_indices = @transform_4, window_bounds = array<i64: 1, 16, 128>}, {transform_indices = @transform_5, window_bounds = array<i64: 1, 2, 8>}]} {
    %c0 = arith.constant 0 : index
    %c0_0 = arith.constant 0 : index
    %c0_1 = arith.constant 0 : index
    %0 = vector.load %arg1[%c0, %c0_0, %c0_1] : memref<1x16x64xf32, #tpu.memory_space<vmem>>, vector<1x16x64xf32>
    %1 = vector.shape_cast %0 : vector<1x16x64xf32> to vector<16x64xf32>
    %cst = arith.constant 0.000000e+00 : f32
    %2 = vector.broadcast %cst : f32 to vector<1x64xf32>
    %3 = tpu.concatenate %2, %1, %2 in 0 : vector<1x64xf32>, vector<16x64xf32>, vector<1x64xf32> -> vector<18x64xf32>
    %4 = vector.extract_strided_slice %3 {offsets = [0, 0], sizes = [16, 64], strides = [1, 1]} : vector<18x64xf32> to vector<16x64xf32>
    %5 = arith.truncf %4 : vector<16x64xf32> to vector<16x64xbf16>
    %c0_2 = arith.constant 0 : index
    %c0_3 = arith.constant 0 : index
    %c0_4 = arith.constant 0 : index
    %6 = vector.load %arg2[%c0_2, %c0_3, %c0_4] : memref<3x64x128xbf16, #tpu.memory_space<vmem>>, vector<1x64x128xbf16>
    %7 = vector.shape_cast %6 : vector<1x64x128xbf16> to vector<64x128xbf16>
    %cst_5 = arith.constant dense<0.000000e+00> : vector<16x128xf32>
    %8 = tpu.matmul %5, %7, %cst_5 {dimension_numbers = #tpu.dot_dimension_numbers<[1], [0], [0], [1], [0, 0, 1, 1], [], []>} : vector<16x64xbf16>, vector<64x128xbf16>, vector<16x128xf32> -> vector<16x128xf32>
    %9 = vector.extract_strided_slice %3 {offsets = [1, 0], sizes = [16, 64], strides = [1, 1]} : vector<18x64xf32> to vector<16x64xf32>
    %10 = arith.truncf %9 : vector<16x64xf32> to vector<16x64xbf16>
    %c1 = arith.constant 1 : index
    %c0_6 = arith.constant 0 : index
    %c0_7 = arith.constant 0 : index
    %11 = vector.load %arg2[%c1, %c0_6, %c0_7] : memref<3x64x128xbf16, #tpu.memory_space<vmem>>, vector<1x64x128xbf16>
    %12 = vector.shape_cast %11 : vector<1x64x128xbf16> to vector<64x128xbf16>
    %cst_8 = arith.constant dense<0.000000e+00> : vector<16x128xf32>
    %13 = tpu.matmul %10, %12, %cst_8 {dimension_numbers = #tpu.dot_dimension_numbers<[1], [0], [0], [1], [0, 0, 1, 1], [], []>} : vector<16x64xbf16>, vector<64x128xbf16>, vector<16x128xf32> -> vector<16x128xf32>
    %14 = arith.addf %8, %13 : vector<16x128xf32>
    %15 = vector.extract_strided_slice %3 {offsets = [2, 0], sizes = [16, 64], strides = [1, 1]} : vector<18x64xf32> to vector<16x64xf32>
    %16 = arith.truncf %15 : vector<16x64xf32> to vector<16x64xbf16>
    %c2 = arith.constant 2 : index
    %c0_9 = arith.constant 0 : index
    %c0_10 = arith.constant 0 : index
    %17 = vector.load %arg2[%c2, %c0_9, %c0_10] : memref<3x64x128xbf16, #tpu.memory_space<vmem>>, vector<1x64x128xbf16>
    %18 = vector.shape_cast %17 : vector<1x64x128xbf16> to vector<64x128xbf16>
    %cst_11 = arith.constant dense<0.000000e+00> : vector<16x128xf32>
    %19 = tpu.matmul %16, %18, %cst_11 {dimension_numbers = #tpu.dot_dimension_numbers<[1], [0], [0], [1], [0, 0, 1, 1], [], []>} : vector<16x64xbf16>, vector<64x128xbf16>, vector<16x128xf32> -> vector<16x128xf32>
    %20 = arith.addf %14, %19 : vector<16x128xf32>
    %c0_12 = arith.constant 0 : index
    %c0_13 = arith.constant 0 : index
    %c0_14 = arith.constant 0 : index
    %21 = vector.load %arg5[%c0_12, %c0_13, %c0_14] : memref<1x16x128xf32, #tpu.memory_space<vmem>>, vector<1x16x128xf32>
    %22 = vector.shape_cast %21 : vector<1x16x128xf32> to vector<16x128xf32>
    %23 = vector.shape_cast %20 : vector<16x128xf32> to vector<1x16x128xf32>
    tpu.vector_store %arg5[%c0_12, %c0_13, %c0_14], %23 {strides = array<i32>} : memref<1x16x128xf32, #tpu.memory_space<vmem>>, vector<1x16x128xf32>,
    %cst_15 = arith.constant dense<0.000000e+00> : vector<128xf32>
    %24 = vector.multi_reduction <add>, %20, %cst_15 [0] : vector<16x128xf32> to vector<128xf32>
    %25 = vector.shape_cast %24 : vector<128xf32> to vector<1x128xf32>
    %26 = arith.mulf %20, %20 : vector<16x128xf32>
    %cst_16 = arith.constant dense<0.000000e+00> : vector<128xf32>
    %27 = vector.multi_reduction <add>, %26, %cst_16 [0] : vector<16x128xf32> to vector<128xf32>
    %28 = vector.shape_cast %27 : vector<128xf32> to vector<1x128xf32>
    %29 = tpu.concatenate %25, %28 in 0 : vector<1x128xf32>, vector<1x128xf32> -> vector<2x128xf32>
    %30 = vector.extract_strided_slice %29 {offsets = [0, 0], sizes = [2, 8], strides = [1, 1]} : vector<2x128xf32> to vector<2x8xf32>
    %31 = vector.extract_strided_slice %29 {offsets = [0, 8], sizes = [2, 8], strides = [1, 1]} : vector<2x128xf32> to vector<2x8xf32>
    %32 = arith.addf %30, %31 : vector<2x8xf32>
    %33 = vector.extract_strided_slice %29 {offsets = [0, 16], sizes = [2, 8], strides = [1, 1]} : vector<2x128xf32> to vector<2x8xf32>
    %34 = arith.addf %32, %33 : vector<2x8xf32>
    %35 = vector.extract_strided_slice %29 {offsets = [0, 24], sizes = [2, 8], strides = [1, 1]} : vector<2x128xf32> to vector<2x8xf32>
    %36 = arith.addf %34, %35 : vector<2x8xf32>
    %37 = vector.extract_strided_slice %29 {offsets = [0, 32], sizes = [2, 8], strides = [1, 1]} : vector<2x128xf32> to vector<2x8xf32>
    %38 = arith.addf %36, %37 : vector<2x8xf32>
    %39 = vector.extract_strided_slice %29 {offsets = [0, 40], sizes = [2, 8], strides = [1, 1]} : vector<2x128xf32> to vector<2x8xf32>
    %40 = arith.addf %38, %39 : vector<2x8xf32>
    %41 = vector.extract_strided_slice %29 {offsets = [0, 48], sizes = [2, 8], strides = [1, 1]} : vector<2x128xf32> to vector<2x8xf32>
    %42 = arith.addf %40, %41 : vector<2x8xf32>
    %43 = vector.extract_strided_slice %29 {offsets = [0, 56], sizes = [2, 8], strides = [1, 1]} : vector<2x128xf32> to vector<2x8xf32>
    %44 = arith.addf %42, %43 : vector<2x8xf32>
    %45 = vector.extract_strided_slice %29 {offsets = [0, 64], sizes = [2, 8], strides = [1, 1]} : vector<2x128xf32> to vector<2x8xf32>
    %46 = arith.addf %44, %45 : vector<2x8xf32>
    %47 = vector.extract_strided_slice %29 {offsets = [0, 72], sizes = [2, 8], strides = [1, 1]} : vector<2x128xf32> to vector<2x8xf32>
    %48 = arith.addf %46, %47 : vector<2x8xf32>
    %49 = vector.extract_strided_slice %29 {offsets = [0, 80], sizes = [2, 8], strides = [1, 1]} : vector<2x128xf32> to vector<2x8xf32>
    %50 = arith.addf %48, %49 : vector<2x8xf32>
    %51 = vector.extract_strided_slice %29 {offsets = [0, 88], sizes = [2, 8], strides = [1, 1]} : vector<2x128xf32> to vector<2x8xf32>
    %52 = arith.addf %50, %51 : vector<2x8xf32>
    %53 = vector.extract_strided_slice %29 {offsets = [0, 96], sizes = [2, 8], strides = [1, 1]} : vector<2x128xf32> to vector<2x8xf32>
    %54 = arith.addf %52, %53 : vector<2x8xf32>
    %55 = vector.extract_strided_slice %29 {offsets = [0, 104], sizes = [2, 8], strides = [1, 1]} : vector<2x128xf32> to vector<2x8xf32>
    %56 = arith.addf %54, %55 : vector<2x8xf32>
    %57 = vector.extract_strided_slice %29 {offsets = [0, 112], sizes = [2, 8], strides = [1, 1]} : vector<2x128xf32> to vector<2x8xf32>
    %58 = arith.addf %56, %57 : vector<2x8xf32>
    %59 = vector.extract_strided_slice %29 {offsets = [0, 120], sizes = [2, 8], strides = [1, 1]} : vector<2x128xf32> to vector<2x8xf32>
    %60 = arith.addf %58, %59 : vector<2x8xf32>
    %c0_17 = arith.constant 0 : index
    %c0_18 = arith.constant 0 : index
    %c0_19 = arith.constant 0 : index
    %61 = vector.load %arg6[%c0_17, %c0_18, %c0_19] : memref<1x2x8xf32, #tpu.memory_space<vmem>>, vector<1x2x8xf32>
    %62 = vector.shape_cast %61 : vector<1x2x8xf32> to vector<2x8xf32>
    %63 = vector.shape_cast %60 : vector<2x8xf32> to vector<1x2x8xf32>
    tpu.vector_store %arg6[%c0_17, %c0_18, %c0_19], %63 {strides = array<i32>} : memref<1x2x8xf32, #tpu.memory_space<vmem>>, vector<1x2x8xf32>,
    return
  }
  func.func @transform_0(%arg0: i32) -> (i32, i32, i32) {
    %c0_i32 = arith.constant 0 : i32
    %c0_i32_0 = arith.constant 0 : i32
    %c0_i32_1 = arith.constant 0 : i32
    return %arg0, %c0_i32, %c0_i32_0 : i32, i32, i32
  }
  func.func @transform_1(%arg0: i32) -> (i32, i32, i32) {
    %c0_i32 = arith.constant 0 : i32
    %c0_i32_0 = arith.constant 0 : i32
    %c0_i32_1 = arith.constant 0 : i32
    %c0_i32_2 = arith.constant 0 : i32
    return %c0_i32, %c0_i32_0, %c0_i32_1 : i32, i32, i32
  }
  func.func @transform_2(%arg0: i32) -> (i32, i32) {
    %c0_i32 = arith.constant 0 : i32
    %c0_i32_0 = arith.constant 0 : i32
    %c0_i32_1 = arith.constant 0 : i32
    return %c0_i32, %c0_i32_0 : i32, i32
  }
  func.func @transform_3(%arg0: i32) -> (i32, i32) {
    %c0_i32 = arith.constant 0 : i32
    %c0_i32_0 = arith.constant 0 : i32
    %c0_i32_1 = arith.constant 0 : i32
    return %c0_i32, %c0_i32_0 : i32, i32
  }
  func.func @transform_4(%arg0: i32) -> (i32, i32, i32) {
    %c0_i32 = arith.constant 0 : i32
    %c0_i32_0 = arith.constant 0 : i32
    %c0_i32_1 = arith.constant 0 : i32
    return %arg0, %c0_i32, %c0_i32_0 : i32, i32, i32
  }
  func.func @transform_5(%arg0: i32) -> (i32, i32, i32) {
    %c0_i32 = arith.constant 0 : i32
    %c0_i32_0 = arith.constant 0 : i32
    %c0_i32_1 = arith.constant 0 : i32
    return %arg0, %c0_i32, %c0_i32_0 : i32, i32, i32
  }
}

module attributes {stable_mosaic.version = 11 : i64} {
  func.func @bn_relu_kernel(%arg0: i32, %arg1: memref<1x16x128xf32, #tpu.memory_space<vmem>>, %arg2: memref<1x128xf32, #tpu.memory_space<vmem>>, %arg3: memref<1x128xf32, #tpu.memory_space<vmem>>, %arg4: memref<1x16x128xf32, #tpu.memory_space<vmem>>) attributes {dimension_semantics = [#tpu.dimension_semantics<parallel>], iteration_bounds = array<i64: 2>, scalar_prefetch = 0 : i64, scratch_operands = 0 : i64, tpu.core_type = #tpu.core_type<tc>, window_params = [{transform_indices = @transform_0, window_bounds = array<i64: 1, 16, 128>}, {pipeline_mode = #tpu.pipeline_mode<synchronous>, transform_indices = @transform_1, window_bounds = array<i64: 1, 128>}, {pipeline_mode = #tpu.pipeline_mode<synchronous>, transform_indices = @transform_2, window_bounds = array<i64: 1, 128>}, {transform_indices = @transform_3, window_bounds = array<i64: 1, 16, 128>}]} {
    %c0 = arith.constant 0 : index
    %c0_0 = arith.constant 0 : index
    %c0_1 = arith.constant 0 : index
    %0 = vector.load %arg1[%c0, %c0_0, %c0_1] : memref<1x16x128xf32, #tpu.memory_space<vmem>>, vector<1x16x128xf32>
    %1 = vector.shape_cast %0 : vector<1x16x128xf32> to vector<16x128xf32>
    %c0_2 = arith.constant 0 : index
    %c0_3 = arith.constant 0 : index
    %2 = vector.load %arg2[%c0_2, %c0_3] : memref<1x128xf32, #tpu.memory_space<vmem>>, vector<1x128xf32>
    %3 = vector.broadcast %2 : vector<1x128xf32> to vector<16x128xf32>
    %4 = arith.mulf %1, %3 : vector<16x128xf32>
    %c0_4 = arith.constant 0 : index
    %c0_5 = arith.constant 0 : index
    %5 = vector.load %arg3[%c0_4, %c0_5] : memref<1x128xf32, #tpu.memory_space<vmem>>, vector<1x128xf32>
    %6 = vector.broadcast %5 : vector<1x128xf32> to vector<16x128xf32>
    %7 = arith.addf %4, %6 : vector<16x128xf32>
    %cst = arith.constant 0.000000e+00 : f32
    %8 = vector.broadcast %cst : f32 to vector<16x128xf32>
    %9 = arith.maximumf %7, %8 : vector<16x128xf32>
    %c0_6 = arith.constant 0 : index
    %c0_7 = arith.constant 0 : index
    %c0_8 = arith.constant 0 : index
    %10 = vector.load %arg4[%c0_6, %c0_7, %c0_8] : memref<1x16x128xf32, #tpu.memory_space<vmem>>, vector<1x16x128xf32>
    %11 = vector.shape_cast %10 : vector<1x16x128xf32> to vector<16x128xf32>
    %12 = vector.shape_cast %9 : vector<16x128xf32> to vector<1x16x128xf32>
    tpu.vector_store %arg4[%c0_6, %c0_7, %c0_8], %12 {strides = array<i32>} : memref<1x16x128xf32, #tpu.memory_space<vmem>>, vector<1x16x128xf32>,
    return
  }
  func.func @transform_0(%arg0: i32) -> (i32, i32, i32) {
    %c0_i32 = arith.constant 0 : i32
    %c0_i32_0 = arith.constant 0 : i32
    %c0_i32_1 = arith.constant 0 : i32
    return %arg0, %c0_i32, %c0_i32_0 : i32, i32, i32
  }
  func.func @transform_1(%arg0: i32) -> (i32, i32) {
    %c0_i32 = arith.constant 0 : i32
    %c0_i32_0 = arith.constant 0 : i32
    %c0_i32_1 = arith.constant 0 : i32
    return %c0_i32, %c0_i32_0 : i32, i32
  }
  func.func @transform_2(%arg0: i32) -> (i32, i32) {
    %c0_i32 = arith.constant 0 : i32
    %c0_i32_0 = arith.constant 0 : i32
    %c0_i32_1 = arith.constant 0 : i32
    return %c0_i32, %c0_i32_0 : i32, i32
  }
  func.func @transform_3(%arg0: i32) -> (i32, i32, i32) {
    %c0_i32 = arith.constant 0 : i32
    %c0_i32_0 = arith.constant 0 : i32
    %c0_i32_1 = arith.constant 0 : i32
    return %arg0, %c0_i32, %c0_i32_0 : i32, i32, i32
  }
}

module attributes {stable_mosaic.version = 11 : i64} {
  func.func @conv_bn_kernel(%arg0: i32, %arg1: memref<1x16x128xf32, #tpu.memory_space<vmem>>, %arg2: memref<3x128x128xbf16, #tpu.memory_space<vmem>>, %arg3: memref<1x128xf32, #tpu.memory_space<vmem>>, %arg4: memref<1x128xf32, #tpu.memory_space<vmem>>, %arg5: memref<1x16x128xf32, #tpu.memory_space<vmem>>, %arg6: memref<1x2x8xf32, #tpu.memory_space<vmem>>) attributes {dimension_semantics = [#tpu.dimension_semantics<parallel>], iteration_bounds = array<i64: 2>, scalar_prefetch = 0 : i64, scratch_operands = 0 : i64, tpu.core_type = #tpu.core_type<tc>, window_params = [{transform_indices = @transform_0, window_bounds = array<i64: 1, 16, 128>}, {pipeline_mode = #tpu.pipeline_mode<synchronous>, transform_indices = @transform_1, window_bounds = array<i64: 3, 128, 128>}, {pipeline_mode = #tpu.pipeline_mode<synchronous>, transform_indices = @transform_2, window_bounds = array<i64: 1, 128>}, {pipeline_mode = #tpu.pipeline_mode<synchronous>, transform_indices = @transform_3, window_bounds = array<i64: 1, 128>}, {transform_indices = @transform_4, window_bounds = array<i64: 1, 16, 128>}, {transform_indices = @transform_5, window_bounds = array<i64: 1, 2, 8>}]} {
    %c0 = arith.constant 0 : index
    %c0_0 = arith.constant 0 : index
    %c0_1 = arith.constant 0 : index
    %0 = vector.load %arg1[%c0, %c0_0, %c0_1] : memref<1x16x128xf32, #tpu.memory_space<vmem>>, vector<1x16x128xf32>
    %1 = vector.shape_cast %0 : vector<1x16x128xf32> to vector<16x128xf32>
    %c0_2 = arith.constant 0 : index
    %c0_3 = arith.constant 0 : index
    %2 = vector.load %arg3[%c0_2, %c0_3] : memref<1x128xf32, #tpu.memory_space<vmem>>, vector<1x128xf32>
    %3 = vector.broadcast %2 : vector<1x128xf32> to vector<16x128xf32>
    %4 = arith.mulf %1, %3 : vector<16x128xf32>
    %c0_4 = arith.constant 0 : index
    %c0_5 = arith.constant 0 : index
    %5 = vector.load %arg4[%c0_4, %c0_5] : memref<1x128xf32, #tpu.memory_space<vmem>>, vector<1x128xf32>
    %6 = vector.broadcast %5 : vector<1x128xf32> to vector<16x128xf32>
    %7 = arith.addf %4, %6 : vector<16x128xf32>
    %cst = arith.constant 0.000000e+00 : f32
    %8 = vector.broadcast %cst : f32 to vector<16x128xf32>
    %9 = arith.maximumf %7, %8 : vector<16x128xf32>
    %cst_6 = arith.constant 0.000000e+00 : f32
    %10 = vector.broadcast %cst_6 : f32 to vector<1x128xf32>
    %11 = tpu.concatenate %10, %9, %10 in 0 : vector<1x128xf32>, vector<16x128xf32>, vector<1x128xf32> -> vector<18x128xf32>
    %12 = vector.extract_strided_slice %11 {offsets = [0, 0], sizes = [16, 128], strides = [1, 1]} : vector<18x128xf32> to vector<16x128xf32>
    %13 = arith.truncf %12 : vector<16x128xf32> to vector<16x128xbf16>
    %c0_7 = arith.constant 0 : index
    %c0_8 = arith.constant 0 : index
    %c0_9 = arith.constant 0 : index
    %14 = vector.load %arg2[%c0_7, %c0_8, %c0_9] : memref<3x128x128xbf16, #tpu.memory_space<vmem>>, vector<1x128x128xbf16>
    %15 = vector.shape_cast %14 : vector<1x128x128xbf16> to vector<128x128xbf16>
    %cst_10 = arith.constant dense<0.000000e+00> : vector<16x128xf32>
    %16 = tpu.matmul %13, %15, %cst_10 {dimension_numbers = #tpu.dot_dimension_numbers<[1], [0], [0], [1], [0, 0, 1, 1], [], []>} : vector<16x128xbf16>, vector<128x128xbf16>, vector<16x128xf32> -> vector<16x128xf32>
    %17 = vector.extract_strided_slice %11 {offsets = [1, 0], sizes = [16, 128], strides = [1, 1]} : vector<18x128xf32> to vector<16x128xf32>
    %18 = arith.truncf %17 : vector<16x128xf32> to vector<16x128xbf16>
    %c1 = arith.constant 1 : index
    %c0_11 = arith.constant 0 : index
    %c0_12 = arith.constant 0 : index
    %19 = vector.load %arg2[%c1, %c0_11, %c0_12] : memref<3x128x128xbf16, #tpu.memory_space<vmem>>, vector<1x128x128xbf16>
    %20 = vector.shape_cast %19 : vector<1x128x128xbf16> to vector<128x128xbf16>
    %cst_13 = arith.constant dense<0.000000e+00> : vector<16x128xf32>
    %21 = tpu.matmul %18, %20, %cst_13 {dimension_numbers = #tpu.dot_dimension_numbers<[1], [0], [0], [1], [0, 0, 1, 1], [], []>} : vector<16x128xbf16>, vector<128x128xbf16>, vector<16x128xf32> -> vector<16x128xf32>
    %22 = arith.addf %16, %21 : vector<16x128xf32>
    %23 = vector.extract_strided_slice %11 {offsets = [2, 0], sizes = [16, 128], strides = [1, 1]} : vector<18x128xf32> to vector<16x128xf32>
    %24 = arith.truncf %23 : vector<16x128xf32> to vector<16x128xbf16>
    %c2 = arith.constant 2 : index
    %c0_14 = arith.constant 0 : index
    %c0_15 = arith.constant 0 : index
    %25 = vector.load %arg2[%c2, %c0_14, %c0_15] : memref<3x128x128xbf16, #tpu.memory_space<vmem>>, vector<1x128x128xbf16>
    %26 = vector.shape_cast %25 : vector<1x128x128xbf16> to vector<128x128xbf16>
    %cst_16 = arith.constant dense<0.000000e+00> : vector<16x128xf32>
    %27 = tpu.matmul %24, %26, %cst_16 {dimension_numbers = #tpu.dot_dimension_numbers<[1], [0], [0], [1], [0, 0, 1, 1], [], []>} : vector<16x128xbf16>, vector<128x128xbf16>, vector<16x128xf32> -> vector<16x128xf32>
    %28 = arith.addf %22, %27 : vector<16x128xf32>
    %c0_17 = arith.constant 0 : index
    %c0_18 = arith.constant 0 : index
    %c0_19 = arith.constant 0 : index
    %29 = vector.load %arg5[%c0_17, %c0_18, %c0_19] : memref<1x16x128xf32, #tpu.memory_space<vmem>>, vector<1x16x128xf32>
    %30 = vector.shape_cast %29 : vector<1x16x128xf32> to vector<16x128xf32>
    %31 = vector.shape_cast %28 : vector<16x128xf32> to vector<1x16x128xf32>
    tpu.vector_store %arg5[%c0_17, %c0_18, %c0_19], %31 {strides = array<i32>} : memref<1x16x128xf32, #tpu.memory_space<vmem>>, vector<1x16x128xf32>,
    %cst_20 = arith.constant dense<0.000000e+00> : vector<128xf32>
    %32 = vector.multi_reduction <add>, %28, %cst_20 [0] : vector<16x128xf32> to vector<128xf32>
    %33 = vector.shape_cast %32 : vector<128xf32> to vector<1x128xf32>
    %34 = arith.mulf %28, %28 : vector<16x128xf32>
    %cst_21 = arith.constant dense<0.000000e+00> : vector<128xf32>
    %35 = vector.multi_reduction <add>, %34, %cst_21 [0] : vector<16x128xf32> to vector<128xf32>
    %36 = vector.shape_cast %35 : vector<128xf32> to vector<1x128xf32>
    %37 = tpu.concatenate %33, %36 in 0 : vector<1x128xf32>, vector<1x128xf32> -> vector<2x128xf32>
    %38 = vector.extract_strided_slice %37 {offsets = [0, 0], sizes = [2, 8], strides = [1, 1]} : vector<2x128xf32> to vector<2x8xf32>
    %39 = vector.extract_strided_slice %37 {offsets = [0, 8], sizes = [2, 8], strides = [1, 1]} : vector<2x128xf32> to vector<2x8xf32>
    %40 = arith.addf %38, %39 : vector<2x8xf32>
    %41 = vector.extract_strided_slice %37 {offsets = [0, 16], sizes = [2, 8], strides = [1, 1]} : vector<2x128xf32> to vector<2x8xf32>
    %42 = arith.addf %40, %41 : vector<2x8xf32>
    %43 = vector.extract_strided_slice %37 {offsets = [0, 24], sizes = [2, 8], strides = [1, 1]} : vector<2x128xf32> to vector<2x8xf32>
    %44 = arith.addf %42, %43 : vector<2x8xf32>
    %45 = vector.extract_strided_slice %37 {offsets = [0, 32], sizes = [2, 8], strides = [1, 1]} : vector<2x128xf32> to vector<2x8xf32>
    %46 = arith.addf %44, %45 : vector<2x8xf32>
    %47 = vector.extract_strided_slice %37 {offsets = [0, 40], sizes = [2, 8], strides = [1, 1]} : vector<2x128xf32> to vector<2x8xf32>
    %48 = arith.addf %46, %47 : vector<2x8xf32>
    %49 = vector.extract_strided_slice %37 {offsets = [0, 48], sizes = [2, 8], strides = [1, 1]} : vector<2x128xf32> to vector<2x8xf32>
    %50 = arith.addf %48, %49 : vector<2x8xf32>
    %51 = vector.extract_strided_slice %37 {offsets = [0, 56], sizes = [2, 8], strides = [1, 1]} : vector<2x128xf32> to vector<2x8xf32>
    %52 = arith.addf %50, %51 : vector<2x8xf32>
    %53 = vector.extract_strided_slice %37 {offsets = [0, 64], sizes = [2, 8], strides = [1, 1]} : vector<2x128xf32> to vector<2x8xf32>
    %54 = arith.addf %52, %53 : vector<2x8xf32>
    %55 = vector.extract_strided_slice %37 {offsets = [0, 72], sizes = [2, 8], strides = [1, 1]} : vector<2x128xf32> to vector<2x8xf32>
    %56 = arith.addf %54, %55 : vector<2x8xf32>
    %57 = vector.extract_strided_slice %37 {offsets = [0, 80], sizes = [2, 8], strides = [1, 1]} : vector<2x128xf32> to vector<2x8xf32>
    %58 = arith.addf %56, %57 : vector<2x8xf32>
    %59 = vector.extract_strided_slice %37 {offsets = [0, 88], sizes = [2, 8], strides = [1, 1]} : vector<2x128xf32> to vector<2x8xf32>
    %60 = arith.addf %58, %59 : vector<2x8xf32>
    %61 = vector.extract_strided_slice %37 {offsets = [0, 96], sizes = [2, 8], strides = [1, 1]} : vector<2x128xf32> to vector<2x8xf32>
    %62 = arith.addf %60, %61 : vector<2x8xf32>
    %63 = vector.extract_strided_slice %37 {offsets = [0, 104], sizes = [2, 8], strides = [1, 1]} : vector<2x128xf32> to vector<2x8xf32>
    %64 = arith.addf %62, %63 : vector<2x8xf32>
    %65 = vector.extract_strided_slice %37 {offsets = [0, 112], sizes = [2, 8], strides = [1, 1]} : vector<2x128xf32> to vector<2x8xf32>
    %66 = arith.addf %64, %65 : vector<2x8xf32>
    %67 = vector.extract_strided_slice %37 {offsets = [0, 120], sizes = [2, 8], strides = [1, 1]} : vector<2x128xf32> to vector<2x8xf32>
    %68 = arith.addf %66, %67 : vector<2x8xf32>
    %c0_22 = arith.constant 0 : index
    %c0_23 = arith.constant 0 : index
    %c0_24 = arith.constant 0 : index
    %69 = vector.load %arg6[%c0_22, %c0_23, %c0_24] : memref<1x2x8xf32, #tpu.memory_space<vmem>>, vector<1x2x8xf32>
    %70 = vector.shape_cast %69 : vector<1x2x8xf32> to vector<2x8xf32>
    %71 = vector.shape_cast %68 : vector<2x8xf32> to vector<1x2x8xf32>
    tpu.vector_store %arg6[%c0_22, %c0_23, %c0_24], %71 {strides = array<i32>} : memref<1x2x8xf32, #tpu.memory_space<vmem>>, vector<1x2x8xf32>,
    return
  }
  func.func @transform_0(%arg0: i32) -> (i32, i32, i32) {
    %c0_i32 = arith.constant 0 : i32
    %c0_i32_0 = arith.constant 0 : i32
    %c0_i32_1 = arith.constant 0 : i32
    return %arg0, %c0_i32, %c0_i32_0 : i32, i32, i32
  }
  func.func @transform_1(%arg0: i32) -> (i32, i32, i32) {
    %c0_i32 = arith.constant 0 : i32
    %c0_i32_0 = arith.constant 0 : i32
    %c0_i32_1 = arith.constant 0 : i32
    %c0_i32_2 = arith.constant 0 : i32
    return %c0_i32, %c0_i32_0, %c0_i32_1 : i32, i32, i32
  }
  func.func @transform_2(%arg0: i32) -> (i32, i32) {
    %c0_i32 = arith.constant 0 : i32
    %c0_i32_0 = arith.constant 0 : i32
    %c0_i32_1 = arith.constant 0 : i32
    return %c0_i32, %c0_i32_0 : i32, i32
  }
  func.func @transform_3(%arg0: i32) -> (i32, i32) {
    %c0_i32 = arith.constant 0 : i32
    %c0_i32_0 = arith.constant 0 : i32
    %c0_i32_1 = arith.constant 0 : i32
    return %c0_i32, %c0_i32_0 : i32, i32
  }
  func.func @transform_4(%arg0: i32) -> (i32, i32, i32) {
    %c0_i32 = arith.constant 0 : i32
    %c0_i32_0 = arith.constant 0 : i32
    %c0_i32_1 = arith.constant 0 : i32
    return %arg0, %c0_i32, %c0_i32_0 : i32, i32, i32
  }
  func.func @transform_5(%arg0: i32) -> (i32, i32, i32) {
    %c0_i32 = arith.constant 0 : i32
    %c0_i32_0 = arith.constant 0 : i32
    %c0_i32_1 = arith.constant 0 : i32
    return %arg0, %c0_i32, %c0_i32_0 : i32, i32, i32
  }
}

</mosaic_0001>

<llo_original>
// kernel: tile.23
$region0: #{tile.23}
  #allocation0 [shape = 's32[1]{0}', space=sflag, size = 0x4, scoped, tag = 'scoped memory for tile.23']
  %s0 = inlined_call_operand.vmem [shape: f32[8], index: 0, kind: input, shape index: {}]
  %s1 = inlined_call_operand.vmem [shape: f32[16,8], index: 1, kind: output, shape index: {}]
  // Predicated region
  $region2: #{tile.23} parent=0 // pred_check
    _
  $region3: #{tile.23} parent=0 // pred_check_branch
    %3 = sbr.rel (0) target = $region5
  $region4: #{tile.23} parent=0 // pred_region
    _
  $region5: #{tile.23} parent=0 // pred_fallthru
    _
  %v4 = vld [vmem:[%s0] ss:$0 sm:$0xff]
  %5 = vst [vmem:[%s1] sm:$0xff] %v4
  %s6 = scalar_lea.vmem %s1, 8
  %7 = vst [vmem:[%s6] sm:$0xff] %v4

// kernel: tile.24
$region0: #{tile.24}
  %s0 = inlined_call_operand.vmem [shape: f32[16,8], index: 0, kind: input, shape index: {}]
  %s1 = inlined_call_operand.vmem [shape: f32[1,128], index: 1, kind: output, shape index: {}]
  $region1: #{tile.24} parent=0
    #allocation0 [shape = 'u8[4096]{0}', space=vmem, size = 0x1000, scoped, tag = 'scoped mem for output reshape']
    %v2 = vld [vmem:[%s0] sm:$0x1]
    %vm3 = vcmask 64512
    %4 = vst.msk [vmem:[#allocation0] sm:$0x1] %vm3, %v2
    %s5 = scalar_lea.vmem %s0, 15
    %v6 = vld [vmem:[%s5] sm:$0x1]
    %7 = vrot.lane.b32.xlu0 %v6, 120
    %v8 = vpop.permute.xlu0 %7
    %vm9 = vcmask 1048512
    %10 = vst.msk [vmem:[#allocation0] sm:$0x1] %vm9, %v8
    %s11 = scalar_lea.vmem %s0, 14
    %v12 = vld [vmem:[%s11] sm:$0x1]
    %13 = vrot.lane.b32.xlu0 %v12, 112
    %v14 = vpop.permute.xlu0 %13
    %vm15 = vcmask 982912
    %16 = vst.msk [vmem:[#allocation0] sm:$0x1] %vm15, %v14
    %s17 = scalar_lea.vmem %s0, 13
    %v18 = vld [vmem:[%s17] sm:$0x1]
    %19 = vrot.lane.b32.xlu0 %v18, 104
    %v20 = vpop.permute.xlu0 %19
    %vm21 = vcmask 917312
    %22 = vst.msk [vmem:[#allocation0] sm:$0x1] %vm21, %v20
    %s23 = scalar_lea.vmem %s0, 12
    %v24 = vld [vmem:[%s23] sm:$0x1]
    %25 = vrot.lane.b32.xlu0 %v24, 96
    %v26 = vpop.permute.xlu0 %25
    %vm27 = vcmask 851712
    %28 = vst.msk [vmem:[#allocation0] sm:$0x1] %vm27, %v26
    %s29 = scalar_lea.vmem %s0, 11
    %v30 = vld [vmem:[%s29] sm:$0x1]
    %31 = vrot.lane.b32.xlu0 %v30, 88
    %v32 = vpop.permute.xlu0 %31
    %vm33 = vcmask 786112
    %34 = vst.msk [vmem:[#allocation0] sm:$0x1] %vm33, %v32
    %s35 = scalar_lea.vmem %s0, 10
    %v36 = vld [vmem:[%s35] sm:$0x1]
    %37 = vrot.lane.b32.xlu0 %v36, 80
    %v38 = vpop.permute.xlu0 %37
    %vm39 = vcmask 720512
    %40 = vst.msk [vmem:[#allocation0] sm:$0x1] %vm39, %v38
    %s41 = scalar_lea.vmem %s0, 9
    %v42 = vld [vmem:[%s41] sm:$0x1]
    %43 = vrot.lane.b32.xlu0 %v42, 72
    %v44 = vpop.permute.xlu0 %43
    %vm45 = vcmask 654912
    %46 = vst.msk [vmem:[#allocation0] sm:$0x1] %vm45, %v44
    %s47 = scalar_lea.vmem %s0, 8
    %v48 = vld [vmem:[%s47] sm:$0x1]
    %49 = vrot.lane.b32.xlu0 %v48, 64
    %v50 = vpop.permute.xlu0 %49
    %vm51 = vcmask 589312
    %52 = vst.msk [vmem:[#allocation0] sm:$0x1] %vm51, %v50
    %s53 = scalar_lea.vmem %s0, 7
    %v54 = vld [vmem:[%s53] sm:$0x1]
    %55 = vrot.lane.b32.xlu0 %v54, 56
    %v56 = vpop.permute.xlu0 %55
    %vm57 = vcmask 523712
    %58 = vst.msk [vmem:[#allocation0] sm:$0x1] %vm57, %v56
    %s59 = scalar_lea.vmem %s0, 6
    %v60 = vld [vmem:[%s59] sm:$0x1]
    %61 = vrot.lane.b32.xlu0 %v60, 48
    %v62 = vpop.permute.xlu0 %61
    %vm63 = vcmask 458112
    %64 = vst.msk [vmem:[#allocation0] sm:$0x1] %vm63, %v62
    %s65 = scalar_lea.vmem %s0, 5
    %v66 = vld [vmem:[%s65] sm:$0x1]
    %67 = vrot.lane.b32.xlu0 %v66, 40
    %v68 = vpop.permute.xlu0 %67
    %vm69 = vcmask 392512
    %70 = vst.msk [vmem:[#allocation0] sm:$0x1] %vm69, %v68
    %s71 = scalar_lea.vmem %s0, 4
    %v72 = vld [vmem:[%s71] sm:$0x1]
    %73 = vrot.lane.b32.xlu0 %v72, 32
    %v74 = vpop.permute.xlu0 %73
    %vm75 = vcmask 326912
    %76 = vst.msk [vmem:[#allocation0] sm:$0x1] %vm75, %v74
    %s77 = scalar_lea.vmem %s0, 3
    %v78 = vld [vmem:[%s77] sm:$0x1]
    %79 = vrot.lane.b32.xlu0 %v78, 24
    %v80 = vpop.permute.xlu0 %79
    %vm81 = vcmask 261312
    %82 = vst.msk [vmem:[#allocation0] sm:$0x1] %vm81, %v80
    %s83 = scalar_lea.vmem %s0, 2
    %v84 = vld [vmem:[%s83] sm:$0x1]
    %85 = vrot.lane.b32.xlu0 %v84, 16
    %v86 = vpop.permute.xlu0 %85
    %vm87 = vcmask 195712
    %88 = vst.msk [vmem:[#allocation0] sm:$0x1] %vm87, %v86
    %s89 = scalar_lea.vmem %s0, 1
    %v90 = vld [vmem:[%s89] sm:$0x1]
    %91 = vrot.lane.b32.xlu0 %v90, 8
    %v92 = vpop.permute.xlu0 %91
    %vm93 = vcmask 130112
    %94 = vst.msk [vmem:[#allocation0] sm:$0x1] %vm93, %v92
    %s96 = ssub.s32 2, 1
    %v97 = vld [vmem:[#allocation0] sm:%s96]
    %s99 = ssub.s32 2, 1
    %100 = vst [vmem:[%s1] sm:%s99] %v97

// kernel: double_conv.5
$region0: #{double_conv.5}
  #allocation0 [shape = 'u32[]', space=smem, size = 0x4, offset = 0x4, fixed_abs, tag = 'smem constant byte address 0x4 - core index']
  #allocation1 [shape = 'u32[72,128]{1,0:T(1,128)}', space=vmem, size = 0x9000, scoped, tag = 'internal scratch']
  %s0 = inlined_call_operand.vmem [shape: f32[2,16,128], index: 0, kind: input, shape index: {}]
  %s1 = inlined_call_operand.vmem [shape: f32[1,128], index: 1, kind: input, shape index: {}]
  %s2 = inlined_call_operand.vmem [shape: f32[1,128], index: 2, kind: input, shape index: {}]
  %s3 = inlined_call_operand.vmem [shape: f32[2,16,128], index: 3, kind: output, shape index: {}]
  %s4 = sld [smem:[#allocation0]]
  $region45: #{double_conv.5} parent=0
    _
  %s6 = ssub.s32 1, %s4
  %s7 = scalar_select 0, %s6, %s4
  loop: start=0, step=1, limit=4
  $region2: #{double_conv.5} parent=0 // loop_pre_header
    _
  $region3: #{double_conv.5} parent=0 // loop_header
    %s9 = sphi 0, %s13
    %p10 = scmp.ge.s32.totalorder %s9, 4
    %s19 = sphi 0, %s21
    %s22 = sphi 0, %s19
    %s23 = sphi 0, %s22
    %s39 = sphi 0, %s23
    %s43 = sphi 0, %s43
    %s45 = sphi 0, %s43
    %s46 = sphi 0, %s45
    %s60 = sphi 0, %s46
    %s64 = sphi 0, %s64
    %s66 = sphi 0, %s64
    %s67 = sphi 0, %s66
    %s81 = sphi 0, %s67
    %s87 = sphi 0, %s89
    %s90 = sphi 0, %s87
    %s91 = sphi 0, %s90
    %s107 = sphi 0, %s91
  $region4: #{double_conv.5} parent=0 // loop_header_branch
    %12 = sbr.rel (%p10) target = $region8
  $region5: #{double_conv.5} parent=0 // loop_body
    %s14 = ssub.s32 %s9, 1
    %s15 = ssub.s32 %s9, 2
    %s16 = sadd.s32 %s9, 1
    %s17 = ssub.s32 %s9, %s16
    %p18 = scmp.eq.s32.totalorder %s17, 0
    %s20 = sadd.s32 %s19, 1
    %s21 = scalar_select %p18, %s19, %s20
    %p24 = pneg %p18
    %p25 = scmp.eq.s32.totalorder %s9, 1
    %p26 = por %p24, %p25
    %p27 = scmp.ne.s32.totalorder %s19, %s22
    %p28 = scmp.eq.s32.totalorder %s9, 0
    %p29 = por %p27, %p28
    %p30 = scmp.ne.s32.totalorder %s19, %s22
    %p31 = scmp.eq.s32.totalorder %s14, 1
    %p32 = por %p30, %p31
    %p33 = scmp.ne.s32.totalorder %s22, %s23
    %p34 = scmp.eq.s32.totalorder %s14, 0
    %p35 = por %p33, %p34
    %p36 = scmp.ne.s32.totalorder %s22, %s23
    %p37 = scmp.eq.s32.totalorder %s15, 1
    %p38 = por %p36, %p37
    %p40 = scmp.ne.s32.totalorder %s23, %s39
    %p41 = scmp.eq.s32.totalorder %s15, 0
    %p42 = por %p40, %p41
    %s44 = sadd.s32 %s43, 1
    %p47 = scmp.eq.s32.totalorder %s9, 1
    %p48 = scmp.ne.s32.totalorder %s43, %s45
    %p49 = scmp.eq.s32.totalorder %s9, 0
    %p50 = por %p48, %p49
    %p51 = scmp.ne.s32.totalorder %s43, %s45
    %p52 = scmp.eq.s32.totalorder %s14, 1
    %p53 = por %p51, %p52
    %p54 = scmp.ne.s32.totalorder %s45, %s46
    %p55 = scmp.eq.s32.totalorder %s14, 0
    %p56 = por %p54, %p55
    %p57 = scmp.ne.s32.totalorder %s45, %s46
    %p58 = scmp.eq.s32.totalorder %s15, 1
    %p59 = por %p57, %p58
    %p61 = scmp.ne.s32.totalorder %s46, %s60
    %p62 = scmp.eq.s32.totalorder %s15, 0
    %p63 = por %p61, %p62
    %s65 = sadd.s32 %s64, 1
    %p68 = scmp.eq.s32.totalorder %s9, 1
    %p69 = scmp.ne.s32.totalorder %s64, %s66
    %p70 = scmp.eq.s32.totalorder %s9, 0
    %p71 = por %p69, %p70
    %p72 = scmp.ne.s32.totalorder %s64, %s66
    %p73 = scmp.eq.s32.totalorder %s14, 1
    %p74 = por %p72, %p73
    %p75 = scmp.ne.s32.totalorder %s66, %s67
    %p76 = scmp.eq.s32.totalorder %s14, 0
    %p77 = por %p75, %p76
    %p78 = scmp.ne.s32.totalorder %s66, %s67
    %p79 = scmp.eq.s32.totalorder %s15, 1
    %p80 = por %p78, %p79
    %p82 = scmp.ne.s32.totalorder %s67, %s81
    %p83 = scmp.eq.s32.totalorder %s15, 0
    %p84 = por %p82, %p83
    %s85 = ssub.s32 %s9, %s16
    %p86 = scmp.eq.s32.totalorder %s85, 0
    %s88 = sadd.s32 %s87, 1
    %s89 = scalar_select %p86, %s87, %s88
    %p92 = pneg %p86
    %p93 = scmp.eq.s32.totalorder %s9, 1
    %p94 = por %p92, %p93
    %p95 = scmp.ne.s32.totalorder %s87, %s90
    %p96 = scmp.eq.s32.totalorder %s9, 0
    %p97 = por %p95, %p96
    %p98 = scmp.ne.s32.totalorder %s87, %s90
    %p99 = scmp.eq.s32.totalorder %s14, 1
    %p100 = por %p98, %p99
    %p101 = scmp.ne.s32.totalorder %s90, %s91
    %p102 = scmp.eq.s32.totalorder %s14, 0
    %p103 = por %p101, %p102
    %p104 = scmp.ne.s32.totalorder %s90, %s91
    %p105 = scmp.eq.s32.totalorder %s15, 1
    %p106 = por %p104, %p105
    %p108 = scmp.ne.s32.totalorder %s91, %s107
    %p109 = scmp.eq.s32.totalorder %s15, 0
    %p110 = por %p108, %p109
    %p111 = scmp.le.s32.totalorder 1, %s9
    %p112 = scmp.lt.s32.totalorder %s9, 3
    %p113 = pnand %p111, %p112
    %p114 = pneg %p113
    // Predicated region
    $region9: #{double_conv.5} parent=5 // pred_check
      _
    $region10: #{double_conv.5} parent=5 // pred_check_branch
      %116 = sbr.rel (%p113) target = $region12
    $region11: #{double_conv.5} parent=5 // pred_region
      %s117 = ssub.s32 %s9, 1
      // Predicated region
      $region13: #{double_conv.5} parent=11 // pred_check
        %p118 = pneg %p56
      $region14: #{double_conv.5} parent=11 // pred_check_branch
        %120 = sbr.rel (%p118) target = $region16
      $region15: #{double_conv.5} parent=11 // pred_region
        _
      $region16: #{double_conv.5} parent=11 // pred_fallthru
        _
      // Predicated region
      $region17: #{double_conv.5} parent=11 // pred_check
        %p121 = pneg %p77
      $region18: #{double_conv.5} parent=11 // pred_check_branch
        %123 = sbr.rel (%p121) target = $region20
      $region19: #{double_conv.5} parent=11 // pred_region
        _
      $region20: #{double_conv.5} parent=11 // pred_fallthru
        _
    $region12: #{double_conv.5} parent=5 // pred_fallthru
      _
    %p124 = scmp.lt.s32.totalorder %s9, 2
    // Predicated region
    $region21: #{double_conv.5} parent=5 // pred_check
      %p125 = pneg %p124
    $region22: #{double_conv.5} parent=5 // pred_check_branch
      %127 = sbr.rel (%p125) target = $region24
    $region23: #{double_conv.5} parent=5 // pred_region
      // Predicated region
      $region25: #{double_conv.5} parent=23 // pred_check
        %p128 = pneg %p29
      $region26: #{double_conv.5} parent=23 // pred_check_branch
        %130 = sbr.rel (%p128) target = $region28
      $region27: #{double_conv.5} parent=23 // pred_region
        %p131 = scmp.lt.s32.totalorder %s9, 1
        %s132 = scalar_select %p131, %s9, 1
        %s133 = smul.addr %s132, 2
        %s134 = smul.addr %s133, 8
        %s135 = scalar_lea.vmem %s0, %s134
      $region28: #{double_conv.5} parent=23 // pred_fallthru
        _
    $region24: #{double_conv.5} parent=5 // pred_fallthru
      _
    %p136 = scmp.le.s32.totalorder 1, %s9
    %p137 = scmp.lt.s32.totalorder %s9, 3
    %p138 = pnand %p136, %p137
    %p139 = pneg %p138
    // Predicated region
    $region29: #{double_conv.5} parent=5 // pred_check
      _
    $region30: #{double_conv.5} parent=5 // pred_check_branch
      %141 = sbr.rel (%p138) target = $region32
    $region31: #{double_conv.5} parent=5 // pred_region
      %s142 = ssub.s32 %s9, 1
      %p143 = scmp.lt.s32.totalorder %s14, 1
      %s144 = scalar_select %p143, %s14, 1
      %s145 = smul.addr %s144, 2
      %s146 = smul.addr %s145, 8
      %s147 = scalar_lea.vmem %s0, %s146
      %p148 = pneg %p35
      %p149 = pneg %p32
      %p150 = pneg %p56
      %p151 = pneg %p53
      %p152 = pneg %p77
      %p153 = pneg %p74
      %p154 = pneg %p103
      %p155 = pneg %p100
      %p156 = scmp.lt.s32.totalorder %s14, 1
      %s157 = scalar_select %p156, %s14, 1
      %s158 = smul.addr %s157, 2
      %s159 = smul.addr %s158, 8
      %s160 = scalar_lea.vmem %s3, %s159
      %p161 = scmp.lt.s32.totalorder %s14, 1
      %s162 = scalar_select %p161, %s14, 1
      %s163 = smul.addr %s162, 2
      %s164 = smul.addr %s163, 8
      %s165 = scalar_lea.vmem %s0, %s164
      %p166 = scmp.lt.s32.totalorder %s14, 1
      %s167 = scalar_select %p166, %s14, 1
      %s168 = smul.addr %s167, 2
      %s169 = smul.addr %s168, 8
      %s170 = scalar_lea.vmem %s3, %s169
      %v171 = vld [vmem:[%s165] sm:$0xff]
      %v172 = vld [vmem:[%s165 + $0x8] sm:$0xff]
      %v173 = vld [vmem:[%s1] sm:$0x1]
      %v175 = vperm.slane %v173, 0
      %v177 = vmul.f32 %v171, %v175
      %v178 = vmul.f32 %v172, %v175
      %v179 = vld [vmem:[%s2] sm:$0x1]
      %v181 = vperm.slane %v179, 0
      %v183 = vadd.f32 %v177, %v181
      %v184 = vadd.f32 %v178, %v181
      %v185 = vmax.f32 %v183, 0.0
      %v186 = vmax.f32 %v184, 0.0
      %187 = vst [vmem:[%s170] sm:$0xff] %v185
      %188 = vst [vmem:[%s170 + $0x8] sm:$0xff] %v186
      %p189 = scmp.lt.s32.totalorder %s14, 1
      %s190 = scalar_select %p189, %s14, 1
      %s191 = smul.addr %s190, 2
      %s192 = smul.addr %s191, 8
      %s193 = scalar_lea.vmem %s3, %s192
      // Predicated region
      $region33: #{double_conv.5} parent=31 // pred_check
        %p194 = pneg %p100
      $region34: #{double_conv.5} parent=31 // pred_check_branch
        %196 = sbr.rel (%p194) target = $region36
      $region35: #{double_conv.5} parent=31 // pred_region
        _
      $region36: #{double_conv.5} parent=31 // pred_fallthru
        _
    $region32: #{double_conv.5} parent=5 // pred_fallthru
      _
    %p197 = scmp.le.s32.totalorder 2, %s9
    // Predicated region
    $region37: #{double_conv.5} parent=5 // pred_check
      %p198 = pneg %p197
    $region38: #{double_conv.5} parent=5 // pred_check_branch
      %200 = sbr.rel (%p198) target = $region40
    $region39: #{double_conv.5} parent=5 // pred_region
      %s201 = ssub.s32 %s9, 2
      // Predicated region
      $region41: #{double_conv.5} parent=39 // pred_check
        %p202 = pneg %p106
      $region42: #{double_conv.5} parent=39 // pred_check_branch
        %204 = sbr.rel (%p202) target = $region44
      $region43: #{double_conv.5} parent=39 // pred_region
        %p205 = scmp.lt.s32.totalorder %s15, 1
        %s206 = scalar_select %p205, %s15, 1
        %s207 = smul.addr %s206, 2
        %s208 = smul.addr %s207, 8
        %s209 = scalar_lea.vmem %s3, %s208
      $region44: #{double_conv.5} parent=39 // pred_fallthru
        _
    $region40: #{double_conv.5} parent=5 // pred_fallthru
      _
  $region6: #{double_conv.5} parent=0 // loop_footer
    %s13 = sadd.s32 1, %s9
  $region7: #{double_conv.5} parent=0 // loop_footer_branch
    %8 = sbr.rel target = $region3
  $region8: #{double_conv.5} parent=0 // loop_exit
    _

// kernel: double_conv.3
$region0: #{double_conv.3}
  #allocation0 [shape = 'u32[]', space=smem, size = 0x4, offset = 0x4, fixed_abs, tag = 'smem constant byte address 0x4 - core index']
  #allocation1 [shape = 'u32[72,128]{1,0:T(1,128)}', space=vmem, size = 0x9000, scoped, tag = 'internal scratch']
  %s0 = inlined_call_operand.vmem [shape: f32[2,16,64], index: 0, kind: input, shape index: {}]
  %s1 = inlined_call_operand.vmem [shape: bf16[3,64,128], index: 1, kind: input, shape index: {}]
  %s2 = inlined_call_operand.vmem [shape: f32[1,64], index: 2, kind: input, shape index: {}, may-alias: {2,3}]
  %s3 = inlined_call_operand.vmem [shape: f32[1,64], index: 3, kind: input, shape index: {}, may-alias: {2,3}]
  %s4 = inlined_call_operand.vmem [shape: f32[2,16,128], index: 4, kind: output, shape index: {0}]
  %s5 = inlined_call_operand.vmem [shape: f32[2,2,8], index: 5, kind: output, shape index: {1}]
  %6 = xla_tuple %s4, %s5
  %s7 = sld [smem:[#allocation0]]
  $region57: #{double_conv.3} parent=0
    _
  %s9 = ssub.s32 1, %s7
  %s10 = scalar_select 0, %s9, %s7
  loop: start=0, step=1, limit=4
  $region2: #{double_conv.3} parent=0 // loop_pre_header
    _
  $region3: #{double_conv.3} parent=0 // loop_header
    %s12 = sphi 0, %s16
    %p13 = scmp.ge.s32.totalorder %s12, 4
    %s22 = sphi 0, %s24
    %s25 = sphi 0, %s22
    %s26 = sphi 0, %s25
    %s42 = sphi 0, %s26
    %s46 = sphi 0, %s46
    %s48 = sphi 0, %s46
    %s49 = sphi 0, %s48
    %s63 = sphi 0, %s49
    %s67 = sphi 0, %s67
    %s69 = sphi 0, %s67
    %s70 = sphi 0, %s69
    %s84 = sphi 0, %s70
    %s88 = sphi 0, %s88
    %s90 = sphi 0, %s88
    %s91 = sphi 0, %s90
    %s105 = sphi 0, %s91
    %s111 = sphi 0, %s113
    %s114 = sphi 0, %s111
    %s115 = sphi 0, %s114
    %s131 = sphi 0, %s115
    %s137 = sphi 0, %s139
    %s140 = sphi 0, %s137
    %s141 = sphi 0, %s140
    %s157 = sphi 0, %s141
  $region4: #{double_conv.3} parent=0 // loop_header_branch
    %15 = sbr.rel (%p13) target = $region8
  $region5: #{double_conv.3} parent=0 // loop_body
    %s17 = ssub.s32 %s12, 1
    %s18 = ssub.s32 %s12, 2
    %s19 = sadd.s32 %s12, 1
    %s20 = ssub.s32 %s12, %s19
    %p21 = scmp.eq.s32.totalorder %s20, 0
    %s23 = sadd.s32 %s22, 1
    %s24 = scalar_select %p21, %s22, %s23
    %p27 = pneg %p21
    %p28 = scmp.eq.s32.totalorder %s12, 1
    %p29 = por %p27, %p28
    %p30 = scmp.ne.s32.totalorder %s22, %s25
    %p31 = scmp.eq.s32.totalorder %s12, 0
    %p32 = por %p30, %p31
    %p33 = scmp.ne.s32.totalorder %s22, %s25
    %p34 = scmp.eq.s32.totalorder %s17, 1
    %p35 = por %p33, %p34
    %p36 = scmp.ne.s32.totalorder %s25, %s26
    %p37 = scmp.eq.s32.totalorder %s17, 0
    %p38 = por %p36, %p37
    %p39 = scmp.ne.s32.totalorder %s25, %s26
    %p40 = scmp.eq.s32.totalorder %s18, 1
    %p41 = por %p39, %p40
    %p43 = scmp.ne.s32.totalorder %s26, %s42
    %p44 = scmp.eq.s32.totalorder %s18, 0
    %p45 = por %p43, %p44
    %s47 = sadd.s32 %s46, 1
    %p50 = scmp.eq.s32.totalorder %s12, 1
    %p51 = scmp.ne.s32.totalorder %s46, %s48
    %p52 = scmp.eq.s32.totalorder %s12, 0
    %p53 = por %p51, %p52
    %p54 = scmp.ne.s32.totalorder %s46, %s48
    %p55 = scmp.eq.s32.totalorder %s17, 1
    %p56 = por %p54, %p55
    %p57 = scmp.ne.s32.totalorder %s48, %s49
    %p58 = scmp.eq.s32.totalorder %s17, 0
    %p59 = por %p57, %p58
    %p60 = scmp.ne.s32.totalorder %s48, %s49
    %p61 = scmp.eq.s32.totalorder %s18, 1
    %p62 = por %p60, %p61
    %p64 = scmp.ne.s32.totalorder %s49, %s63
    %p65 = scmp.eq.s32.totalorder %s18, 0
    %p66 = por %p64, %p65
    %s68 = sadd.s32 %s67, 1
    %p71 = scmp.eq.s32.totalorder %s12, 1
    %p72 = scmp.ne.s32.totalorder %s67, %s69
    %p73 = scmp.eq.s32.totalorder %s12, 0
    %p74 = por %p72, %p73
    %p75 = scmp.ne.s32.totalorder %s67, %s69
    %p76 = scmp.eq.s32.totalorder %s17, 1
    %p77 = por %p75, %p76
    %p78 = scmp.ne.s32.totalorder %s69, %s70
    %p79 = scmp.eq.s32.totalorder %s17, 0
    %p80 = por %p78, %p79
    %p81 = scmp.ne.s32.totalorder %s69, %s70
    %p82 = scmp.eq.s32.totalorder %s18, 1
    %p83 = por %p81, %p82
    %p85 = scmp.ne.s32.totalorder %s70, %s84
    %p86 = scmp.eq.s32.totalorder %s18, 0
    %p87 = por %p85, %p86
    %s89 = sadd.s32 %s88, 1
    %p92 = scmp.eq.s32.totalorder %s12, 1
    %p93 = scmp.ne.s32.totalorder %s88, %s90
    %p94 = scmp.eq.s32.totalorder %s12, 0
    %p95 = por %p93, %p94
    %p96 = scmp.ne.s32.totalorder %s88, %s90
    %p97 = scmp.eq.s32.totalorder %s17, 1
    %p98 = por %p96, %p97
    %p99 = scmp.ne.s32.totalorder %s90, %s91
    %p100 = scmp.eq.s32.totalorder %s17, 0
    %p101 = por %p99, %p100
    %p102 = scmp.ne.s32.totalorder %s90, %s91
    %p103 = scmp.eq.s32.totalorder %s18, 1
    %p104 = por %p102, %p103
    %p106 = scmp.ne.s32.totalorder %s91, %s105
    %p107 = scmp.eq.s32.totalorder %s18, 0
    %p108 = por %p106, %p107
    %s109 = ssub.s32 %s12, %s19
    %p110 = scmp.eq.s32.totalorder %s109, 0
    %s112 = sadd.s32 %s111, 1
    %s113 = scalar_select %p110, %s111, %s112
    %p116 = pneg %p110
    %p117 = scmp.eq.s32.totalorder %s12, 1
    %p118 = por %p116, %p117
    %p119 = scmp.ne.s32.totalorder %s111, %s114
    %p120 = scmp.eq.s32.totalorder %s12, 0
    %p121 = por %p119, %p120
    %p122 = scmp.ne.s32.totalorder %s111, %s114
    %p123 = scmp.eq.s32.totalorder %s17, 1
    %p124 = por %p122, %p123
    %p125 = scmp.ne.s32.totalorder %s114, %s115
    %p126 = scmp.eq.s32.totalorder %s17, 0
    %p127 = por %p125, %p126
    %p128 = scmp.ne.s32.totalorder %s114, %s115
    %p129 = scmp.eq.s32.totalorder %s18, 1
    %p130 = por %p128, %p129
    %p132 = scmp.ne.s32.totalorder %s115, %s131
    %p133 = scmp.eq.s32.totalorder %s18, 0
    %p134 = por %p132, %p133
    %s135 = ssub.s32 %s12, %s19
    %p136 = scmp.eq.s32.totalorder %s135, 0
    %s138 = sadd.s32 %s137, 1
    %s139 = scalar_select %p136, %s137, %s138
    %p142 = pneg %p136
    %p143 = scmp.eq.s32.totalorder %s12, 1
    %p144 = por %p142, %p143
    %p145 = scmp.ne.s32.totalorder %s137, %s140
    %p146 = scmp.eq.s32.totalorder %s12, 0
    %p147 = por %p145, %p146
    %p148 = scmp.ne.s32.totalorder %s137, %s140
    %p149 = scmp.eq.s32.totalorder %s17, 1
    %p150 = por %p148, %p149
    %p151 = scmp.ne.s32.totalorder %s140, %s141
    %p152 = scmp.eq.s32.totalorder %s17, 0
    %p153 = por %p151, %p152
    %p154 = scmp.ne.s32.totalorder %s140, %s141
    %p155 = scmp.eq.s32.totalorder %s18, 1
    %p156 = por %p154, %p155
    %p158 = scmp.ne.s32.totalorder %s141, %s157
    %p159 = scmp.eq.s32.totalorder %s18, 0
    %p160 = por %p158, %p159
    %p161 = scmp.le.s32.totalorder 1, %s12
    %p162 = scmp.lt.s32.totalorder %s12, 3
    %p163 = pnand %p161, %p162
    %p164 = pneg %p163
    // Predicated region
    $region9: #{double_conv.3} parent=5 // pred_check
      _
    $region10: #{double_conv.3} parent=5 // pred_check_branch
      %166 = sbr.rel (%p163) target = $region12
    $region11: #{double_conv.3} parent=5 // pred_region
      %s167 = ssub.s32 %s12, 1
      // Predicated region
      $region13: #{double_conv.3} parent=11 // pred_check
        %p168 = pneg %p59
      $region14: #{double_conv.3} parent=11 // pred_check_branch
        %170 = sbr.rel (%p168) target = $region16
      $region15: #{double_conv.3} parent=11 // pred_region
        _
      $region16: #{double_conv.3} parent=11 // pred_fallthru
        _
      // Predicated region
      $region17: #{double_conv.3} parent=11 // pred_check
        %p171 = pneg %p80
      $region18: #{double_conv.3} parent=11 // pred_check_branch
        %173 = sbr.rel (%p171) target = $region20
      $region19: #{double_conv.3} parent=11 // pred_region
        _
      $region20: #{double_conv.3} parent=11 // pred_fallthru
        _
      // Predicated region
      $region21: #{double_conv.3} parent=11 // pred_check
        %p174 = pneg %p101
      $region22: #{double_conv.3} parent=11 // pred_check_branch
        %176 = sbr.rel (%p174) target = $region24
      $region23: #{double_conv.3} parent=11 // pred_region
        _
      $region24: #{double_conv.3} parent=11 // pred_fallthru
        _
    $region12: #{double_conv.3} parent=5 // pred_fallthru
      _
    %p177 = scmp.lt.s32.totalorder %s12, 2
    // Predicated region
    $region25: #{double_conv.3} parent=5 // pred_check
      %p178 = pneg %p177
    $region26: #{double_conv.3} parent=5 // pred_check_branch
      %180 = sbr.rel (%p178) target = $region28
    $region27: #{double_conv.3} parent=5 // pred_region
      // Predicated region
      $region29: #{double_conv.3} parent=27 // pred_check
        %p181 = pneg %p32
      $region30: #{double_conv.3} parent=27 // pred_check_branch
        %183 = sbr.rel (%p181) target = $region32
      $region31: #{double_conv.3} parent=27 // pred_region
        %p184 = scmp.lt.s32.totalorder %s12, 1
        %s185 = scalar_select %p184, %s12, 1
        %s186 = smul.addr %s185, 2
        %s187 = smul.addr %s186, 8
        %s188 = scalar_lea.vmem %s0, %s187
      $region32: #{double_conv.3} parent=27 // pred_fallthru
        _
    $region28: #{double_conv.3} parent=5 // pred_fallthru
      _
    %p189 = scmp.le.s32.totalorder 1, %s12
    %p190 = scmp.lt.s32.totalorder %s12, 3
    %p191 = pnand %p189, %p190
    %p192 = pneg %p191
    // Predicated region
    $region33: #{double_conv.3} parent=5 // pred_check
      _
    $region34: #{double_conv.3} parent=5 // pred_check_branch
      %194 = sbr.rel (%p191) target = $region36
    $region35: #{double_conv.3} parent=5 // pred_region
      %s195 = ssub.s32 %s12, 1
      %p196 = scmp.lt.s32.totalorder %s17, 1
      %s197 = scalar_select %p196, %s17, 1
      %s198 = smul.addr %s197, 2
      %s199 = smul.addr %s198, 8
      %s200 = scalar_lea.vmem %s0, %s199
      %p201 = pneg %p38
      %p202 = pneg %p35
      %p203 = pneg %p59
      %p204 = pneg %p56
      %p205 = pneg %p80
      %p206 = pneg %p77
      %p207 = pneg %p101
      %p208 = pneg %p98
      %p209 = pneg %p127
      %p210 = pneg %p124
      %p211 = scmp.lt.s32.totalorder %s17, 1
      %s212 = scalar_select %p211, %s17, 1
      %s213 = smul.addr %s212, 2
      %s214 = smul.addr %s213, 8
      %s215 = scalar_lea.vmem %s4, %s214
      %p216 = pneg %p153
      %p217 = pneg %p150
      %p218 = scmp.lt.s32.totalorder %s17, 1
      %s219 = scalar_select %p218, %s17, 1
      %s220 = smul.addr %s219, 2
      %s221 = scalar_lea.vmem %s5, %s220
      %p222 = scmp.lt.s32.totalorder %s17, 1
      %s223 = scalar_select %p222, %s17, 1
      %s224 = smul.addr %s223, 2
      %s225 = smul.addr %s224, 8
      %s226 = scalar_lea.vmem %s0, %s225
      %p227 = scmp.lt.s32.totalorder %s17, 1
      %s228 = scalar_select %p227, %s17, 1
      %s229 = smul.addr %s228, 2
      %s230 = smul.addr %s229, 8
      %s231 = scalar_lea.vmem %s4, %s230
      %p232 = scmp.lt.s32.totalorder %s17, 1
      %s233 = scalar_select %p232, %s17, 1
      %s234 = smul.addr %s233, 2
      %s235 = scalar_lea.vmem %s5, %s234
      %v237 = vld [vmem:[%s226] sm:$0xff]
      %v238 = vld [vmem:[%s226 + $0x8] sm:$0xff]
      %vm241 = vcmask 1040384
      %v242 = vrot.slane %v237, 7
      %v243 = vrot.slane %v238, 7
      %v244 = vsel %vm241, %v242, %v243
      %v248 = vsel %vm241, 0.0, %v242
      %v249 = vsel %vm241, %v243, 0.0
      %v250 = vpack.c.bf16 %v244, %v248
      %v251 = vld [vmem:[%s1] sm:$0xf]
      %v252 = vld [vmem:[%s1 + $0x4] sm:$0xf]
      %v253 = vld [vmem:[%s1 + $0x8] sm:$0xf]
      %v254 = vld [vmem:[%s1 + $0xc] sm:$0xf]
      %v255 = vld [vmem:[%s1 + $0x10] sm:$0xf]
      %v256 = vld [vmem:[%s1 + $0x14] sm:$0xf]
      %v257 = vld [vmem:[%s1 + $0x18] sm:$0xf]
      %v258 = vld [vmem:[%s1 + $0x1c] sm:$0xf]
      %v259 = vpack.c.bf16 %v249, %v249
      %s260 = scalar_lea.vmem %s1, 32
      %v261 = vld [vmem:[%s260] sm:$0xf]
      %v262 = vld [vmem:[%s260 + $0x4] sm:$0xf]
      %v263 = vld [vmem:[%s260 + $0x8] sm:$0xf]
      %v264 = vld [vmem:[%s260 + $0xc] sm:$0xf]
      %v265 = vld [vmem:[%s260 + $0x10] sm:$0xf]
      %v266 = vld [vmem:[%s260 + $0x14] sm:$0xf]
      %v267 = vld [vmem:[%s260 + $0x18] sm:$0xf]
      %v268 = vld [vmem:[%s260 + $0x1c] sm:$0xf]
      %vm269 = vsmask.f32 7424
      %v271 = vshrl.u32 %v250, 16
      %v273 = vshll.u32 %v250, 16
      %v275 = vrot.slane %v273, 1
      %v276 = vor.u32 %v271, %v275
      %v278 = vshll.u32 %v259, 16
      %v280 = vrot.slane %v278, 1
      %v281 = vsel %vm269, %v276, %v280
      %v290 = vunpack.c.l.b16 %v261
      %v291 = vunpack.c.l.b16 %v262
      %v292 = vunpack.c.l.b16 %v263
      %v293 = vunpack.c.l.b16 %v264
      %v294 = vunpack.c.l.b16 %v265
      %v295 = vunpack.c.l.b16 %v266
      %v296 = vunpack.c.l.b16 %v267
      %v297 = vunpack.c.l.b16 %v268
      %v298 = vpack.c.b16 %v291, %v290
      %v299 = vpack.c.b16 %v293, %v292
      %v300 = vpack.c.b16 %v295, %v294
      %v301 = vpack.c.b16 %v297, %v296
      %vm306 = vcmask 523264
      %v308 = vsel %vm306, %v281, 0
      %310 = vmatpush.bf16.msra.mxu0 0
      %311 = vmatpush.bf16.msra.mxu0 0
      %312 = vmatpush.bf16.msra.mxu0 0
      %313 = vmatpush.bf16.msra.mxu0 0
      %314 = vmatpush.bf16.msra.mxu0 %v301
      %315 = vmatpush.bf16.msra.mxu0 %v300
      %316 = vmatpush.bf16.msra.mxu0 %v299
      %317 = vmatpush.bf16.msra.mxu0 %v298
      %318 = vmatmul.bf16.gmra.mxu0 %v308
      %v319 = vpop.f32.mrf.mxu0
      %v320 = vadd.f32 0.0, %v319
      %v321 = vpop.f32.mrf.mxu0
      %v322 = vadd.f32 0.0, %v321
      %323 = vdwg.mxu0
      %v332 = vunpack.c.l.b16 %v251
      %v333 = vunpack.c.l.b16 %v252
      %v334 = vunpack.c.l.b16 %v253
      %v335 = vunpack.c.l.b16 %v254
      %v336 = vunpack.c.l.b16 %v255
      %v337 = vunpack.c.l.b16 %v256
      %v338 = vunpack.c.l.b16 %v257
      %v339 = vunpack.c.l.b16 %v258
      %v340 = vpack.c.b16 %v333, %v332
      %v341 = vpack.c.b16 %v335, %v334
      %v342 = vpack.c.b16 %v337, %v336
      %v343 = vpack.c.b16 %v339, %v338
      %v348 = vsel %vm306, %v250, 0
      %350 = vmatpush.bf16.msra.mxu0 0
      %351 = vmatpush.bf16.msra.mxu0 0
      %352 = vmatpush.bf16.msra.mxu0 0
      %353 = vmatpush.bf16.msra.mxu0 0
      %354 = vmatpush.bf16.msra.mxu0 %v343
      %355 = vmatpush.bf16.msra.mxu0 %v342
      %356 = vmatpush.bf16.msra.mxu0 %v341
      %357 = vmatpush.bf16.msra.mxu0 %v340
      %358 = vmatmul.bf16.gmra.mxu0 %v348
      %v359 = vpop.f32.mrf.mxu0
      %v360 = vadd.f32 %v320, %v359
      %v361 = vpop.f32.mrf.mxu0
      %v362 = vadd.f32 %v322, %v361
      %363 = vdwg.mxu0
      %s364 = scalar_lea.vmem %s1, 64
      %v365 = vld [vmem:[%s364] sm:$0xf]
      %v366 = vld [vmem:[%s364 + $0x4] sm:$0xf]
      %v367 = vld [vmem:[%s364 + $0x8] sm:$0xf]
      %v368 = vld [vmem:[%s364 + $0xc] sm:$0xf]
      %v369 = vld [vmem:[%s364 + $0x10] sm:$0xf]
      %v370 = vld [vmem:[%s364 + $0x14] sm:$0xf]
      %v371 = vld [vmem:[%s364 + $0x18] sm:$0xf]
      %v372 = vld [vmem:[%s364 + $0x1c] sm:$0xf]
      %vm375 = vcmask 1046528
      %v376 = vrot.slane %v250, 1
      %v377 = vrot.slane %v259, 1
      %v378 = vsel %vm375, %v376, %v377
      %v387 = vunpack.c.l.b16 %v365
      %v388 = vunpack.c.l.b16 %v366
      %v389 = vunpack.c.l.b16 %v367
      %v390 = vunpack.c.l.b16 %v368
      %v391 = vunpack.c.l.b16 %v369
      %v392 = vunpack.c.l.b16 %v370
      %v393 = vunpack.c.l.b16 %v371
      %v394 = vunpack.c.l.b16 %v372
      %v395 = vpack.c.b16 %v388, %v387
      %v396 = vpack.c.b16 %v390, %v389
      %v397 = vpack.c.b16 %v392, %v391
      %v398 = vpack.c.b16 %v394, %v393
      %v404 = vsel %vm306, %v378, 0
      %406 = vmatpush.bf16.msra.mxu0 0
      %407 = vmatpush.bf16.msra.mxu0 0
      %408 = vmatpush.bf16.msra.mxu0 0
      %409 = vmatpush.bf16.msra.mxu0 0
      %410 = vmatpush.bf16.msra.mxu0 %v398
      %411 = vmatpush.bf16.msra.mxu0 %v397
      %412 = vmatpush.bf16.msra.mxu0 %v396
      %413 = vmatpush.bf16.msra.mxu0 %v395
      %414 = vmatmul.bf16.gmra.mxu0 %v404
      %v415 = vpop.f32.mrf.mxu0
      %v416 = vadd.f32 0.0, %v415
      %v417 = vpop.f32.mrf.mxu0
      %v418 = vadd.f32 0.0, %v417
      %419 = vdwg.mxu0
      %v420 = vadd.f32 %v360, %v416
      %v421 = vadd.f32 %v362, %v418
      %422 = vst [vmem:[%s231] sm:$0xff] %v420
      %423 = vst [vmem:[%s231 + $0x8] sm:$0xff] %v421
      %v424 = vadd.f32 %v420, %v421
      %v425 = vrot.slane %v424, 4
      %v426 = vadd.f32 %v424, %v425
      %v427 = vrot.slane %v426, 2
      %v428 = vadd.f32 %v426, %v427
      %v429 = vrot.slane %v428, 1
      %v430 = vadd.f32 %v428, %v429
      %v431 = vmul.f32 %v420, %v420
      %v432 = vmul.f32 %v421, %v421
      %v433 = vadd.f32 %v431, %v432
      %v434 = vrot.slane %v433, 4
      %v435 = vadd.f32 %v433, %v434
      %v436 = vrot.slane %v435, 2
      %v437 = vadd.f32 %v435, %v436
      %v438 = vrot.slane %v437, 1
      %v439 = vadd.f32 %v437, %v438
      %v440 = vsel %vm241, %v430, %v439
      %442 = vrot.lane.b32.xlu0 %v440, 120
      %v443 = vpop.permute.xlu0 %442
      %v445 = vadd.f32 %v440, %v443
      %446 = vrot.lane.b32.xlu0 %v440, 112
      %v447 = vpop.permute.xlu0 %446
      %v449 = vadd.f32 %v445, %v447
      %450 = vrot.lane.b32.xlu0 %v440, 104
      %v451 = vpop.permute.xlu0 %450
      %v453 = vadd.f32 %v449, %v451
      %454 = vrot.lane.b32.xlu0 %v440, 96
      %v455 = vpop.permute.xlu0 %454
      %v457 = vadd.f32 %v453, %v455
      %458 = vrot.lane.b32.xlu0 %v440, 88
      %v459 = vpop.permute.xlu0 %458
      %v461 = vadd.f32 %v457, %v459
      %462 = vrot.lane.b32.xlu0 %v440, 80
      %v463 = vpop.permute.xlu0 %462
      %v465 = vadd.f32 %v461, %v463
      %466 = vrot.lane.b32.xlu0 %v440, 72
      %v467 = vpop.permute.xlu0 %466
      %v469 = vadd.f32 %v465, %v467
      %470 = vrot.lane.b32.xlu0 %v440, 64
      %v471 = vpop.permute.xlu0 %470
      %v473 = vadd.f32 %v469, %v471
      %474 = vrot.lane.b32.xlu0 %v440, 56
      %v475 = vpop.permute.xlu0 %474
      %v477 = vadd.f32 %v473, %v475
      %478 = vrot.lane.b32.xlu0 %v440, 48
      %v479 = vpop.permute.xlu0 %478
      %v481 = vadd.f32 %v477, %v479
      %482 = vrot.lane.b32.xlu0 %v440, 40
      %v483 = vpop.permute.xlu0 %482
      %v485 = vadd.f32 %v481, %v483
      %486 = vrot.lane.b32.xlu0 %v440, 32
      %v487 = vpop.permute.xlu0 %486
      %v489 = vadd.f32 %v485, %v487
      %490 = vrot.lane.b32.xlu0 %v440, 24
      %v491 = vpop.permute.xlu0 %490
      %v493 = vadd.f32 %v489, %v491
      %494 = vrot.lane.b32.xlu0 %v440, 16
      %v495 = vpop.permute.xlu0 %494
      %v497 = vadd.f32 %v493, %v495
      %498 = vrot.lane.b32.xlu0 %v440, 8
      %v499 = vpop.permute.xlu0 %498
      %v501 = vadd.f32 %v497, %v499
      %vm502 = vcmask 58368
      %503 = vst.msk [vmem:[%s235] sm:$0x3] %vm502, %v501
      %p504 = scmp.lt.s32.totalorder %s17, 1
      %s505 = scalar_select %p504, %s17, 1
      %s506 = smul.addr %s505, 2
      %s507 = smul.addr %s506, 8
      %s508 = scalar_lea.vmem %s4, %s507
      %p509 = scmp.lt.s32.totalorder %s17, 1
      %s510 = scalar_select %p509, %s17, 1
      %s511 = smul.addr %s510, 2
      %s512 = scalar_lea.vmem %s5, %s511
      // Predicated region
      $region37: #{double_conv.3} parent=35 // pred_check
        %p513 = pneg %p124
      $region38: #{double_conv.3} parent=35 // pred_check_branch
        %515 = sbr.rel (%p513) target = $region40
      $region39: #{double_conv.3} parent=35 // pred_region
        _
      $region40: #{double_conv.3} parent=35 // pred_fallthru
        _
      // Predicated region
      $region41: #{double_conv.3} parent=35 // pred_check
        %p516 = pneg %p150
      $region42: #{double_conv.3} parent=35 // pred_check_branch
        %518 = sbr.rel (%p516) target = $region44
      $region43: #{double_conv.3} parent=35 // pred_region
        _
      $region44: #{double_conv.3} parent=35 // pred_fallthru
        _
    $region36: #{double_conv.3} parent=5 // pred_fallthru
      _
    %p519 = scmp.le.s32.totalorder 2, %s12
    // Predicated region
    $region45: #{double_conv.3} parent=5 // pred_check
      %p520 = pneg %p519
    $region46: #{double_conv.3} parent=5 // pred_check_branch
      %522 = sbr.rel (%p520) target = $region48
    $region47: #{double_conv.3} parent=5 // pred_region
      %s523 = ssub.s32 %s12, 2
      // Predicated region
      $region49: #{double_conv.3} parent=47 // pred_check
        %p524 = pneg %p130
      $region50: #{double_conv.3} parent=47 // pred_check_branch
        %526 = sbr.rel (%p524) target = $region52
      $region51: #{double_conv.3} parent=47 // pred_region
        %p527 = scmp.lt.s32.totalorder %s18, 1
        %s528 = scalar_select %p527, %s18, 1
        %s529 = smul.addr %s528, 2
        %s530 = smul.addr %s529, 8
        %s531 = scalar_lea.vmem %s4, %s530
      $region52: #{double_conv.3} parent=47 // pred_fallthru
        _
      // Predicated region
      $region53: #{double_conv.3} parent=47 // pred_check
        %p532 = pneg %p156
      $region54: #{double_conv.3} parent=47 // pred_check_branch
        %534 = sbr.rel (%p532) target = $region56
      $region55: #{double_conv.3} parent=47 // pred_region
        %p535 = scmp.lt.s32.totalorder %s18, 1
        %s536 = scalar_select %p535, %s18, 1
        %s537 = smul.addr %s536, 2
        %s538 = scalar_lea.vmem %s5, %s537
      $region56: #{double_conv.3} parent=47 // pred_fallthru
        _
    $region48: #{double_conv.3} parent=5 // pred_fallthru
      _
  $region6: #{double_conv.3} parent=0 // loop_footer
    %s16 = sadd.s32 1, %s12
  $region7: #{double_conv.3} parent=0 // loop_footer_branch
    %11 = sbr.rel target = $region3
  $region8: #{double_conv.3} parent=0 // loop_exit
    _

// kernel: double_conv.4
$region0: #{double_conv.4}
  #allocation0 [shape = 'u32[]', space=smem, size = 0x4, offset = 0x4, fixed_abs, tag = 'smem constant byte address 0x4 - core index']
  #allocation1 [shape = 'u32[72,128]{1,0:T(1,128)}', space=vmem, size = 0x9000, scoped, tag = 'internal scratch']
  %s0 = inlined_call_operand.vmem [shape: f32[2,16,128], index: 0, kind: input, shape index: {}]
  %s1 = inlined_call_operand.vmem [shape: bf16[3,128,128], index: 1, kind: input, shape index: {}]
  %s2 = inlined_call_operand.vmem [shape: f32[1,128], index: 2, kind: input, shape index: {}]
  %s3 = inlined_call_operand.vmem [shape: f32[1,128], index: 3, kind: input, shape index: {}]
  %s4 = inlined_call_operand.vmem [shape: f32[2,16,128], index: 4, kind: output, shape index: {0}]
  %s5 = inlined_call_operand.vmem [shape: f32[2,2,8], index: 5, kind: output, shape index: {1}]
  %6 = xla_tuple %s4, %s5
  %s7 = sld [smem:[#allocation0]]
  $region57: #{double_conv.4} parent=0
    _
  %s9 = ssub.s32 1, %s7
  %s10 = scalar_select 0, %s9, %s7
  loop: start=0, step=1, limit=4
  $region2: #{double_conv.4} parent=0 // loop_pre_header
    _
  $region3: #{double_conv.4} parent=0 // loop_header
    %s12 = sphi 0, %s16
    %p13 = scmp.ge.s32.totalorder %s12, 4
    %s22 = sphi 0, %s24
    %s25 = sphi 0, %s22
    %s26 = sphi 0, %s25
    %s42 = sphi 0, %s26
    %s46 = sphi 0, %s46
    %s48 = sphi 0, %s46
    %s49 = sphi 0, %s48
    %s63 = sphi 0, %s49
    %s67 = sphi 0, %s67
    %s69 = sphi 0, %s67
    %s70 = sphi 0, %s69
    %s84 = sphi 0, %s70
    %s88 = sphi 0, %s88
    %s90 = sphi 0, %s88
    %s91 = sphi 0, %s90
    %s105 = sphi 0, %s91
    %s111 = sphi 0, %s113
    %s114 = sphi 0, %s111
    %s115 = sphi 0, %s114
    %s131 = sphi 0, %s115
    %s137 = sphi 0, %s139
    %s140 = sphi 0, %s137
    %s141 = sphi 0, %s140
    %s157 = sphi 0, %s141
  $region4: #{double_conv.4} parent=0 // loop_header_branch
    %15 = sbr.rel (%p13) target = $region8
  $region5: #{double_conv.4} parent=0 // loop_body
    %s17 = ssub.s32 %s12, 1
    %s18 = ssub.s32 %s12, 2
    %s19 = sadd.s32 %s12, 1
    %s20 = ssub.s32 %s12, %s19
    %p21 = scmp.eq.s32.totalorder %s20, 0
    %s23 = sadd.s32 %s22, 1
    %s24 = scalar_select %p21, %s22, %s23
    %p27 = pneg %p21
    %p28 = scmp.eq.s32.totalorder %s12, 1
    %p29 = por %p27, %p28
    %p30 = scmp.ne.s32.totalorder %s22, %s25
    %p31 = scmp.eq.s32.totalorder %s12, 0
    %p32 = por %p30, %p31
    %p33 = scmp.ne.s32.totalorder %s22, %s25
    %p34 = scmp.eq.s32.totalorder %s17, 1
    %p35 = por %p33, %p34
    %p36 = scmp.ne.s32.totalorder %s25, %s26
    %p37 = scmp.eq.s32.totalorder %s17, 0
    %p38 = por %p36, %p37
    %p39 = scmp.ne.s32.totalorder %s25, %s26
    %p40 = scmp.eq.s32.totalorder %s18, 1
    %p41 = por %p39, %p40
    %p43 = scmp.ne.s32.totalorder %s26, %s42
    %p44 = scmp.eq.s32.totalorder %s18, 0
    %p45 = por %p43, %p44
    %s47 = sadd.s32 %s46, 1
    %p50 = scmp.eq.s32.totalorder %s12, 1
    %p51 = scmp.ne.s32.totalorder %s46, %s48
    %p52 = scmp.eq.s32.totalorder %s12, 0
    %p53 = por %p51, %p52
    %p54 = scmp.ne.s32.totalorder %s46, %s48
    %p55 = scmp.eq.s32.totalorder %s17, 1
    %p56 = por %p54, %p55
    %p57 = scmp.ne.s32.totalorder %s48, %s49
    %p58 = scmp.eq.s32.totalorder %s17, 0
    %p59 = por %p57, %p58
    %p60 = scmp.ne.s32.totalorder %s48, %s49
    %p61 = scmp.eq.s32.totalorder %s18, 1
    %p62 = por %p60, %p61
    %p64 = scmp.ne.s32.totalorder %s49, %s63
    %p65 = scmp.eq.s32.totalorder %s18, 0
    %p66 = por %p64, %p65
    %s68 = sadd.s32 %s67, 1
    %p71 = scmp.eq.s32.totalorder %s12, 1
    %p72 = scmp.ne.s32.totalorder %s67, %s69
    %p73 = scmp.eq.s32.totalorder %s12, 0
    %p74 = por %p72, %p73
    %p75 = scmp.ne.s32.totalorder %s67, %s69
    %p76 = scmp.eq.s32.totalorder %s17, 1
    %p77 = por %p75, %p76
    %p78 = scmp.ne.s32.totalorder %s69, %s70
    %p79 = scmp.eq.s32.totalorder %s17, 0
    %p80 = por %p78, %p79
    %p81 = scmp.ne.s32.totalorder %s69, %s70
    %p82 = scmp.eq.s32.totalorder %s18, 1
    %p83 = por %p81, %p82
    %p85 = scmp.ne.s32.totalorder %s70, %s84
    %p86 = scmp.eq.s32.totalorder %s18, 0
    %p87 = por %p85, %p86
    %s89 = sadd.s32 %s88, 1
    %p92 = scmp.eq.s32.totalorder %s12, 1
    %p93 = scmp.ne.s32.totalorder %s88, %s90
    %p94 = scmp.eq.s32.totalorder %s12, 0
    %p95 = por %p93, %p94
    %p96 = scmp.ne.s32.totalorder %s88, %s90
    %p97 = scmp.eq.s32.totalorder %s17, 1
    %p98 = por %p96, %p97
    %p99 = scmp.ne.s32.totalorder %s90, %s91
    %p100 = scmp.eq.s32.totalorder %s17, 0
    %p101 = por %p99, %p100
    %p102 = scmp.ne.s32.totalorder %s90, %s91
    %p103 = scmp.eq.s32.totalorder %s18, 1
    %p104 = por %p102, %p103
    %p106 = scmp.ne.s32.totalorder %s91, %s105
    %p107 = scmp.eq.s32.totalorder %s18, 0
    %p108 = por %p106, %p107
    %s109 = ssub.s32 %s12, %s19
    %p110 = scmp.eq.s32.totalorder %s109, 0
    %s112 = sadd.s32 %s111, 1
    %s113 = scalar_select %p110, %s111, %s112
    %p116 = pneg %p110
    %p117 = scmp.eq.s32.totalorder %s12, 1
    %p118 = por %p116, %p117
    %p119 = scmp.ne.s32.totalorder %s111, %s114
    %p120 = scmp.eq.s32.totalorder %s12, 0
    %p121 = por %p119, %p120
    %p122 = scmp.ne.s32.totalorder %s111, %s114
    %p123 = scmp.eq.s32.totalorder %s17, 1
    %p124 = por %p122, %p123
    %p125 = scmp.ne.s32.totalorder %s114, %s115
    %p126 = scmp.eq.s32.totalorder %s17, 0
    %p127 = por %p125, %p126
    %p128 = scmp.ne.s32.totalorder %s114, %s115
    %p129 = scmp.eq.s32.totalorder %s18, 1
    %p130 = por %p128, %p129
    %p132 = scmp.ne.s32.totalorder %s115, %s131
    %p133 = scmp.eq.s32.totalorder %s18, 0
    %p134 = por %p132, %p133
    %s135 = ssub.s32 %s12, %s19
    %p136 = scmp.eq.s32.totalorder %s135, 0
    %s138 = sadd.s32 %s137, 1
    %s139 = scalar_select %p136, %s137, %s138
    %p142 = pneg %p136
    %p143 = scmp.eq.s32.totalorder %s12, 1
    %p144 = por %p142, %p143
    %p145 = scmp.ne.s32.totalorder %s137, %s140
    %p146 = scmp.eq.s32.totalorder %s12, 0
    %p147 = por %p145, %p146
    %p148 = scmp.ne.s32.totalorder %s137, %s140
    %p149 = scmp.eq.s32.totalorder %s17, 1
    %p150 = por %p148, %p149
    %p151 = scmp.ne.s32.totalorder %s140, %s141
    %p152 = scmp.eq.s32.totalorder %s17, 0
    %p153 = por %p151, %p152
    %p154 = scmp.ne.s32.totalorder %s140, %s141
    %p155 = scmp.eq.s32.totalorder %s18, 1
    %p156 = por %p154, %p155
    %p158 = scmp.ne.s32.totalorder %s141, %s157
    %p159 = scmp.eq.s32.totalorder %s18, 0
    %p160 = por %p158, %p159
    %p161 = scmp.le.s32.totalorder 1, %s12
    %p162 = scmp.lt.s32.totalorder %s12, 3
    %p163 = pnand %p161, %p162
    %p164 = pneg %p163
    // Predicated region
    $region9: #{double_conv.4} parent=5 // pred_check
      _
    $region10: #{double_conv.4} parent=5 // pred_check_branch
      %166 = sbr.rel (%p163) target = $region12
    $region11: #{double_conv.4} parent=5 // pred_region
      %s167 = ssub.s32 %s12, 1
      // Predicated region
      $region13: #{double_conv.4} parent=11 // pred_check
        %p168 = pneg %p59
      $region14: #{double_conv.4} parent=11 // pred_check_branch
        %170 = sbr.rel (%p168) target = $region16
      $region15: #{double_conv.4} parent=11 // pred_region
        _
      $region16: #{double_conv.4} parent=11 // pred_fallthru
        _
      // Predicated region
      $region17: #{double_conv.4} parent=11 // pred_check
        %p171 = pneg %p80
      $region18: #{double_conv.4} parent=11 // pred_check_branch
        %173 = sbr.rel (%p171) target = $region20
      $region19: #{double_conv.4} parent=11 // pred_region
        _
      $region20: #{double_conv.4} parent=11 // pred_fallthru
        _
      // Predicated region
      $region21: #{double_conv.4} parent=11 // pred_check
        %p174 = pneg %p101
      $region22: #{double_conv.4} parent=11 // pred_check_branch
        %176 = sbr.rel (%p174) target = $region24
      $region23: #{double_conv.4} parent=11 // pred_region
        _
      $region24: #{double_conv.4} parent=11 // pred_fallthru
        _
    $region12: #{double_conv.4} parent=5 // pred_fallthru
      _
    %p177 = scmp.lt.s32.totalorder %s12, 2
    // Predicated region
    $region25: #{double_conv.4} parent=5 // pred_check
      %p178 = pneg %p177
    $region26: #{double_conv.4} parent=5 // pred_check_branch
      %180 = sbr.rel (%p178) target = $region28
    $region27: #{double_conv.4} parent=5 // pred_region
      // Predicated region
      $region29: #{double_conv.4} parent=27 // pred_check
        %p181 = pneg %p32
      $region30: #{double_conv.4} parent=27 // pred_check_branch
        %183 = sbr.rel (%p181) target = $region32
      $region31: #{double_conv.4} parent=27 // pred_region
        %p184 = scmp.lt.s32.totalorder %s12, 1
        %s185 = scalar_select %p184, %s12, 1
        %s186 = smul.addr %s185, 2
        %s187 = smul.addr %s186, 8
        %s188 = scalar_lea.vmem %s0, %s187
      $region32: #{double_conv.4} parent=27 // pred_fallthru
        _
    $region28: #{double_conv.4} parent=5 // pred_fallthru
      _
    %p189 = scmp.le.s32.totalorder 1, %s12
    %p190 = scmp.lt.s32.totalorder %s12, 3
    %p191 = pnand %p189, %p190
    %p192 = pneg %p191
    // Predicated region
    $region33: #{double_conv.4} parent=5 // pred_check
      _
    $region34: #{double_conv.4} parent=5 // pred_check_branch
      %194 = sbr.rel (%p191) target = $region36
    $region35: #{double_conv.4} parent=5 // pred_region
      %s195 = ssub.s32 %s12, 1
      %p196 = scmp.lt.s32.totalorder %s17, 1
      %s197 = scalar_select %p196, %s17, 1
      %s198 = smul.addr %s197, 2
      %s199 = smul.addr %s198, 8
      %s200 = scalar_lea.vmem %s0, %s199
      %p201 = pneg %p38
      %p202 = pneg %p35
      %p203 = pneg %p59
      %p204 = pneg %p56
      %p205 = pneg %p80
      %p206 = pneg %p77
      %p207 = pneg %p101
      %p208 = pneg %p98
      %p209 = pneg %p127
      %p210 = pneg %p124
      %p211 = scmp.lt.s32.totalorder %s17, 1
      %s212 = scalar_select %p211, %s17, 1
      %s213 = smul.addr %s212, 2
      %s214 = smul.addr %s213, 8
      %s215 = scalar_lea.vmem %s4, %s214
      %p216 = pneg %p153
      %p217 = pneg %p150
      %p218 = scmp.lt.s32.totalorder %s17, 1
      %s219 = scalar_select %p218, %s17, 1
      %s220 = smul.addr %s219, 2
      %s221 = scalar_lea.vmem %s5, %s220
      %p222 = scmp.lt.s32.totalorder %s17, 1
      %s223 = scalar_select %p222, %s17, 1
      %s224 = smul.addr %s223, 2
      %s225 = smul.addr %s224, 8
      %s226 = scalar_lea.vmem %s0, %s225
      %p227 = scmp.lt.s32.totalorder %s17, 1
      %s228 = scalar_select %p227, %s17, 1
      %s229 = smul.addr %s228, 2
      %s230 = smul.addr %s229, 8
      %s231 = scalar_lea.vmem %s4, %s230
      %p232 = scmp.lt.s32.totalorder %s17, 1
      %s233 = scalar_select %p232, %s17, 1
      %s234 = smul.addr %s233, 2
      %s235 = scalar_lea.vmem %s5, %s234
      %v236 = vld [vmem:[%s226] sm:$0xff]
      %v237 = vld [vmem:[%s226 + $0x8] sm:$0xff]
      %v238 = vld [vmem:[%s2] sm:$0x1]
      %v240 = vperm.slane %v238, 0
      %v242 = vmul.f32 %v236, %v240
      %v243 = vmul.f32 %v237, %v240
      %v244 = vld [vmem:[%s3] sm:$0x1]
      %v246 = vperm.slane %v244, 0
      %v248 = vadd.f32 %v242, %v246
      %v249 = vadd.f32 %v243, %v246
      %v250 = vmax.f32 %v248, 0.0
      %v251 = vmax.f32 %v249, 0.0
      %vm254 = vcmask 1040384
      %v255 = vrot.slane %v250, 7
      %v256 = vrot.slane %v251, 7
      %v257 = vsel %vm254, %v255, %v256
      %v261 = vsel %vm254, 0.0, %v255
      %v262 = vsel %vm254, %v256, 0.0
      %v263 = vpack.c.bf16 %v257, %v261
      %v264 = vld [vmem:[%s1] sm:$0xf]
      %v265 = vld [vmem:[%s1 + $0x4] sm:$0xf]
      %v266 = vld [vmem:[%s1 + $0x8] sm:$0xf]
      %v267 = vld [vmem:[%s1 + $0xc] sm:$0xf]
      %v268 = vld [vmem:[%s1 + $0x10] sm:$0xf]
      %v269 = vld [vmem:[%s1 + $0x14] sm:$0xf]
      %v270 = vld [vmem:[%s1 + $0x18] sm:$0xf]
      %v271 = vld [vmem:[%s1 + $0x1c] sm:$0xf]
      %v272 = vld [vmem:[%s1 + $0x20] sm:$0xf]
      %v273 = vld [vmem:[%s1 + $0x24] sm:$0xf]
      %v274 = vld [vmem:[%s1 + $0x28] sm:$0xf]
      %v275 = vld [vmem:[%s1 + $0x2c] sm:$0xf]
      %v276 = vld [vmem:[%s1 + $0x30] sm:$0xf]
      %v277 = vld [vmem:[%s1 + $0x34] sm:$0xf]
      %v278 = vld [vmem:[%s1 + $0x38] sm:$0xf]
      %v279 = vld [vmem:[%s1 + $0x3c] sm:$0xf]
      %v280 = vpack.c.bf16 %v262, %v262
      %s281 = scalar_lea.vmem %s1, 64
      %v282 = vld [vmem:[%s281] sm:$0xf]
      %v283 = vld [vmem:[%s281 + $0x4] sm:$0xf]
      %v284 = vld [vmem:[%s281 + $0x8] sm:$0xf]
      %v285 = vld [vmem:[%s281 + $0xc] sm:$0xf]
      %v286 = vld [vmem:[%s281 + $0x10] sm:$0xf]
      %v287 = vld [vmem:[%s281 + $0x14] sm:$0xf]
      %v288 = vld [vmem:[%s281 + $0x18] sm:$0xf]
      %v289 = vld [vmem:[%s281 + $0x1c] sm:$0xf]
      %v290 = vld [vmem:[%s281 + $0x20] sm:$0xf]
      %v291 = vld [vmem:[%s281 + $0x24] sm:$0xf]
      %v292 = vld [vmem:[%s281 + $0x28] sm:$0xf]
      %v293 = vld [vmem:[%s281 + $0x2c] sm:$0xf]
      %v294 = vld [vmem:[%s281 + $0x30] sm:$0xf]
      %v295 = vld [vmem:[%s281 + $0x34] sm:$0xf]
      %v296 = vld [vmem:[%s281 + $0x38] sm:$0xf]
      %v297 = vld [vmem:[%s281 + $0x3c] sm:$0xf]
      %vm298 = vsmask.f32 7424
      %v300 = vshrl.u32 %v263, 16
      %v302 = vshll.u32 %v263, 16
      %v304 = vrot.slane %v302, 1
      %v305 = vor.u32 %v300, %v304
      %v307 = vshll.u32 %v280, 16
      %v309 = vrot.slane %v307, 1
      %v310 = vsel %vm298, %v305, %v309
      %v328 = vunpack.c.l.b16 %v282
      %v329 = vunpack.c.l.b16 %v283
      %v330 = vunpack.c.l.b16 %v284
      %v331 = vunpack.c.l.b16 %v285
      %v332 = vunpack.c.l.b16 %v286
      %v333 = vunpack.c.l.b16 %v287
      %v334 = vunpack.c.l.b16 %v288
      %v335 = vunpack.c.l.b16 %v289
      %v336 = vunpack.c.l.b16 %v290
      %v337 = vunpack.c.l.b16 %v291
      %v338 = vunpack.c.l.b16 %v292
      %v339 = vunpack.c.l.b16 %v293
      %v340 = vunpack.c.l.b16 %v294
      %v341 = vunpack.c.l.b16 %v295
      %v342 = vunpack.c.l.b16 %v296
      %v343 = vunpack.c.l.b16 %v297
      %v344 = vpack.c.b16 %v329, %v328
      %v345 = vpack.c.b16 %v331, %v330
      %v346 = vpack.c.b16 %v333, %v332
      %v347 = vpack.c.b16 %v335, %v334
      %v348 = vpack.c.b16 %v337, %v336
      %v349 = vpack.c.b16 %v339, %v338
      %v350 = vpack.c.b16 %v341, %v340
      %v351 = vpack.c.b16 %v343, %v342
      %360 = vmatpush.bf16.msra.mxu0 %v351
      %361 = vmatpush.bf16.msra.mxu0 %v350
      %362 = vmatpush.bf16.msra.mxu0 %v349
      %363 = vmatpush.bf16.msra.mxu0 %v348
      %364 = vmatpush.bf16.msra.mxu0 %v347
      %365 = vmatpush.bf16.msra.mxu0 %v346
      %366 = vmatpush.bf16.msra.mxu0 %v345
      %367 = vmatpush.bf16.msra.mxu0 %v344
      %368 = vmatmul.bf16.gmra.mxu0 %v310
      %v369 = vpop.f32.mrf.mxu0
      %v370 = vadd.f32 0.0, %v369
      %v371 = vpop.f32.mrf.mxu0
      %v372 = vadd.f32 0.0, %v371
      %373 = vdwg.mxu0
      %v390 = vunpack.c.l.b16 %v264
      %v391 = vunpack.c.l.b16 %v265
      %v392 = vunpack.c.l.b16 %v266
      %v393 = vunpack.c.l.b16 %v267
      %v394 = vunpack.c.l.b16 %v268
      %v395 = vunpack.c.l.b16 %v269
      %v396 = vunpack.c.l.b16 %v270
      %v397 = vunpack.c.l.b16 %v271
      %v398 = vunpack.c.l.b16 %v272
      %v399 = vunpack.c.l.b16 %v273
      %v400 = vunpack.c.l.b16 %v274
      %v401 = vunpack.c.l.b16 %v275
      %v402 = vunpack.c.l.b16 %v276
      %v403 = vunpack.c.l.b16 %v277
      %v404 = vunpack.c.l.b16 %v278
      %v405 = vunpack.c.l.b16 %v279
      %v406 = vpack.c.b16 %v391, %v390
      %v407 = vpack.c.b16 %v393, %v392
      %v408 = vpack.c.b16 %v395, %v394
      %v409 = vpack.c.b16 %v397, %v396
      %v410 = vpack.c.b16 %v399, %v398
      %v411 = vpack.c.b16 %v401, %v400
      %v412 = vpack.c.b16 %v403, %v402
      %v413 = vpack.c.b16 %v405, %v404
      %422 = vmatpush.bf16.msra.mxu0 %v413
      %423 = vmatpush.bf16.msra.mxu0 %v412
      %424 = vmatpush.bf16.msra.mxu0 %v411
      %425 = vmatpush.bf16.msra.mxu0 %v410
      %426 = vmatpush.bf16.msra.mxu0 %v409
      %427 = vmatpush.bf16.msra.mxu0 %v408
      %428 = vmatpush.bf16.msra.mxu0 %v407
      %429 = vmatpush.bf16.msra.mxu0 %v406
      %430 = vmatmul.bf16.gmra.mxu0 %v263
      %v431 = vpop.f32.mrf.mxu0
      %v432 = vadd.f32 %v370, %v431
      %v433 = vpop.f32.mrf.mxu0
      %v434 = vadd.f32 %v372, %v433
      %435 = vdwg.mxu0
      %s436 = scalar_lea.vmem %s1, 128
      %v437 = vld [vmem:[%s436] sm:$0xf]
      %v438 = vld [vmem:[%s436 + $0x4] sm:$0xf]
      %v439 = vld [vmem:[%s436 + $0x8] sm:$0xf]
      %v440 = vld [vmem:[%s436 + $0xc] sm:$0xf]
      %v441 = vld [vmem:[%s436 + $0x10] sm:$0xf]
      %v442 = vld [vmem:[%s436 + $0x14] sm:$0xf]
      %v443 = vld [vmem:[%s436 + $0x18] sm:$0xf]
      %v444 = vld [vmem:[%s436 + $0x1c] sm:$0xf]
      %v445 = vld [vmem:[%s436 + $0x20] sm:$0xf]
      %v446 = vld [vmem:[%s436 + $0x24] sm:$0xf]
      %v447 = vld [vmem:[%s436 + $0x28] sm:$0xf]
      %v448 = vld [vmem:[%s436 + $0x2c] sm:$0xf]
      %v449 = vld [vmem:[%s436 + $0x30] sm:$0xf]
      %v450 = vld [vmem:[%s436 + $0x34] sm:$0xf]
      %v451 = vld [vmem:[%s436 + $0x38] sm:$0xf]
      %v452 = vld [vmem:[%s436 + $0x3c] sm:$0xf]
      %vm455 = vcmask 1046528
      %v456 = vrot.slane %v263, 1
      %v457 = vrot.slane %v280, 1
      %v458 = vsel %vm455, %v456, %v457
      %v476 = vunpack.c.l.b16 %v437
      %v477 = vunpack.c.l.b16 %v438
      %v478 = vunpack.c.l.b16 %v439
      %v479 = vunpack.c.l.b16 %v440
      %v480 = vunpack.c.l.b16 %v441
      %v481 = vunpack.c.l.b16 %v442
      %v482 = vunpack.c.l.b16 %v443
      %v483 = vunpack.c.l.b16 %v444
      %v484 = vunpack.c.l.b16 %v445
      %v485 = vunpack.c.l.b16 %v446
      %v486 = vunpack.c.l.b16 %v447
      %v487 = vunpack.c.l.b16 %v448
      %v488 = vunpack.c.l.b16 %v449
      %v489 = vunpack.c.l.b16 %v450
      %v490 = vunpack.c.l.b16 %v451
      %v491 = vunpack.c.l.b16 %v452
      %v492 = vpack.c.b16 %v477, %v476
      %v493 = vpack.c.b16 %v479, %v478
      %v494 = vpack.c.b16 %v481, %v480
      %v495 = vpack.c.b16 %v483, %v482
      %v496 = vpack.c.b16 %v485, %v484
      %v497 = vpack.c.b16 %v487, %v486
      %v498 = vpack.c.b16 %v489, %v488
      %v499 = vpack.c.b16 %v491, %v490
      %508 = vmatpush.bf16.msra.mxu0 %v499
      %509 = vmatpush.bf16.msra.mxu0 %v498
      %510 = vmatpush.bf16.msra.mxu0 %v497
      %511 = vmatpush.bf16.msra.mxu0 %v496
      %512 = vmatpush.bf16.msra.mxu0 %v495
      %513 = vmatpush.bf16.msra.mxu0 %v494
      %514 = vmatpush.bf16.msra.mxu0 %v493
      %515 = vmatpush.bf16.msra.mxu0 %v492
      %516 = vmatmul.bf16.gmra.mxu0 %v458
      %v517 = vpop.f32.mrf.mxu0
      %v518 = vadd.f32 0.0, %v517
      %v519 = vpop.f32.mrf.mxu0
      %v520 = vadd.f32 0.0, %v519
      %521 = vdwg.mxu0
      %v522 = vadd.f32 %v432, %v518
      %v523 = vadd.f32 %v434, %v520
      %524 = vst [vmem:[%s231] sm:$0xff] %v522
      %525 = vst [vmem:[%s231 + $0x8] sm:$0xff] %v523
      %v526 = vadd.f32 %v522, %v523
      %v527 = vrot.slane %v526, 4
      %v528 = vadd.f32 %v526, %v527
      %v529 = vrot.slane %v528, 2
      %v530 = vadd.f32 %v528, %v529
      %v531 = vrot.slane %v530, 1
      %v532 = vadd.f32 %v530, %v531
      %v533 = vmul.f32 %v522, %v522
      %v534 = vmul.f32 %v523, %v523
      %v535 = vadd.f32 %v533, %v534
      %v536 = vrot.slane %v535, 4
      %v537 = vadd.f32 %v535, %v536
      %v538 = vrot.slane %v537, 2
      %v539 = vadd.f32 %v537, %v538
      %v540 = vrot.slane %v539, 1
      %v541 = vadd.f32 %v539, %v540
      %v542 = vsel %vm254, %v532, %v541
      %544 = vrot.lane.b32.xlu0 %v542, 120
      %v545 = vpop.permute.xlu0 %544
      %v547 = vadd.f32 %v542, %v545
      %548 = vrot.lane.b32.xlu0 %v542, 112
      %v549 = vpop.permute.xlu0 %548
      %v551 = vadd.f32 %v547, %v549
      %552 = vrot.lane.b32.xlu0 %v542, 104
      %v553 = vpop.permute.xlu0 %552
      %v555 = vadd.f32 %v551, %v553
      %556 = vrot.lane.b32.xlu0 %v542, 96
      %v557 = vpop.permute.xlu0 %556
      %v559 = vadd.f32 %v555, %v557
      %560 = vrot.lane.b32.xlu0 %v542, 88
      %v561 = vpop.permute.xlu0 %560
      %v563 = vadd.f32 %v559, %v561
      %564 = vrot.lane.b32.xlu0 %v542, 80
      %v565 = vpop.permute.xlu0 %564
      %v567 = vadd.f32 %v563, %v565
      %568 = vrot.lane.b32.xlu0 %v542, 72
      %v569 = vpop.permute.xlu0 %568
      %v571 = vadd.f32 %v567, %v569
      %572 = vrot.lane.b32.xlu0 %v542, 64
      %v573 = vpop.permute.xlu0 %572
      %v575 = vadd.f32 %v571, %v573
      %576 = vrot.lane.b32.xlu0 %v542, 56
      %v577 = vpop.permute.xlu0 %576
      %v579 = vadd.f32 %v575, %v577
      %580 = vrot.lane.b32.xlu0 %v542, 48
      %v581 = vpop.permute.xlu0 %580
      %v583 = vadd.f32 %v579, %v581
      %584 = vrot.lane.b32.xlu0 %v542, 40
      %v585 = vpop.permute.xlu0 %584
      %v587 = vadd.f32 %v583, %v585
      %588 = vrot.lane.b32.xlu0 %v542, 32
      %v589 = vpop.permute.xlu0 %588
      %v591 = vadd.f32 %v587, %v589
      %592 = vrot.lane.b32.xlu0 %v542, 24
      %v593 = vpop.permute.xlu0 %592
      %v595 = vadd.f32 %v591, %v593
      %596 = vrot.lane.b32.xlu0 %v542, 16
      %v597 = vpop.permute.xlu0 %596
      %v599 = vadd.f32 %v595, %v597
      %600 = vrot.lane.b32.xlu0 %v542, 8
      %v601 = vpop.permute.xlu0 %600
      %v603 = vadd.f32 %v599, %v601
      %vm604 = vcmask 58368
      %605 = vst.msk [vmem:[%s235] sm:$0x3] %vm604, %v603
      %p606 = scmp.lt.s32.totalorder %s17, 1
      %s607 = scalar_select %p606, %s17, 1
      %s608 = smul.addr %s607, 2
      %s609 = smul.addr %s608, 8
      %s610 = scalar_lea.vmem %s4, %s609
      %p611 = scmp.lt.s32.totalorder %s17, 1
      %s612 = scalar_select %p611, %s17, 1
      %s613 = smul.addr %s612, 2
      %s614 = scalar_lea.vmem %s5, %s613
      // Predicated region
      $region37: #{double_conv.4} parent=35 // pred_check
        %p615 = pneg %p124
      $region38: #{double_conv.4} parent=35 // pred_check_branch
        %617 = sbr.rel (%p615) target = $region40
      $region39: #{double_conv.4} parent=35 // pred_region
        _
      $region40: #{double_conv.4} parent=35 // pred_fallthru
        _
      // Predicated region
      $region41: #{double_conv.4} parent=35 // pred_check
        %p618 = pneg %p150
      $region42: #{double_conv.4} parent=35 // pred_check_branch
        %620 = sbr.rel (%p618) target = $region44
      $region43: #{double_conv.4} parent=35 // pred_region
        _
      $region44: #{double_conv.4} parent=35 // pred_fallthru
        _
    $region36: #{double_conv.4} parent=5 // pred_fallthru
      _
    %p621 = scmp.le.s32.totalorder 2, %s12
    // Predicated region
    $region45: #{double_conv.4} parent=5 // pred_check
      %p622 = pneg %p621
    $region46: #{double_conv.4} parent=5 // pred_check_branch
      %624 = sbr.rel (%p622) target = $region48
    $region47: #{double_conv.4} parent=5 // pred_region
      %s625 = ssub.s32 %s12, 2
      // Predicated region
      $region49: #{double_conv.4} parent=47 // pred_check
        %p626 = pneg %p130
      $region50: #{double_conv.4} parent=47 // pred_check_branch
        %628 = sbr.rel (%p626) target = $region52
      $region51: #{double_conv.4} parent=47 // pred_region
        %p629 = scmp.lt.s32.totalorder %s18, 1
        %s630 = scalar_select %p629, %s18, 1
        %s631 = smul.addr %s630, 2
        %s632 = smul.addr %s631, 8
        %s633 = scalar_lea.vmem %s4, %s632
      $region52: #{double_conv.4} parent=47 // pred_fallthru
        _
      // Predicated region
      $region53: #{double_conv.4} parent=47 // pred_check
        %p634 = pneg %p156
      $region54: #{double_conv.4} parent=47 // pred_check_branch
        %636 = sbr.rel (%p634) target = $region56
      $region55: #{double_conv.4} parent=47 // pred_region
        %p637 = scmp.lt.s32.totalorder %s18, 1
        %s638 = scalar_select %p637, %s18, 1
        %s639 = smul.addr %s638, 2
        %s640 = scalar_lea.vmem %s5, %s639
      $region56: #{double_conv.4} parent=47 // pred_fallthru
        _
    $region48: #{double_conv.4} parent=5 // pred_fallthru
      _
  $region6: #{double_conv.4} parent=0 // loop_footer
    %s16 = sadd.s32 1, %s12
  $region7: #{double_conv.4} parent=0 // loop_footer_branch
    %11 = sbr.rel target = $region3
  $region8: #{double_conv.4} parent=0 // loop_exit
    _

</llo_original>
